<compile_context>
chip_gen: v7x
topology: tpu7x:2x2x1
jax: 0.10.0
libtpu: 0.0.40
codegen_flags: <defaults>
</compile_context>

<pallas_src>
import jax
import jax.numpy as jnp
from jax import lax
from jax.experimental import pallas as pl
from jax.experimental.pallas import tpu as pltpu


def _silu(x):
    return x * jax.nn.sigmoid(x)


# ---------------------------------------------------------------------------
# Fused kernel: cv1 (1x3 conv + BN + SiLU) -> cv2 (3x1 conv + BN + SiLU)
# ---------------------------------------------------------------------------
def crossconv_kernel(xt_ref, xm_ref, xb_ref, wl_ref, wr_ref,
                     w1_ref, s1_ref, b1_ref, w2_ref, s2_ref, b2_ref, o_ref):
    # xt/xb: (1, W, Cin) halo rows, xm: (1, TH*W, Cin) tile rows
    # wl/wr: (M, 1) edge masks, w1: (3, Cin, Chid), w2: (3, Chid, Cout)
    # s*/b*: (1, C) folded BN, o: (1, TH*W, Cout)
    W = xt_ref.shape[1]          # one flattened image row
    THW = xm_ref.shape[1]        # rows-in-tile * W
    Cin = xm_ref.shape[2]
    M = THW + 2 * W              # haloed slab rows

    i = pl.program_id(1)
    last = pl.num_programs(1) - 1

    # Haloed input slab: [row above | TH tile rows | row below], flattened as
    # (h, w) -> h*W + w, channels on the lane axis.  Aligned sublane concat.
    x_all = jnp.concatenate(
        [xt_ref[0], xm_ref[0], xb_ref[0]], axis=0).astype(jnp.float32)

    # ---- cv1: 1x3 conv along W + folded BN + SiLU (3 MXU matmuls) ----------
    # Neighbour views come from an 8-row zero-padded copy (aligned concat +
    # static slices); the hoisted wl/wr masks zero the w==0 / w==W-1 columns.
    pad8 = jnp.zeros((8, Cin), jnp.float32)
    x_ext = jnp.concatenate([pad8, x_all, pad8], axis=0)        # (M + 16, Cin)
    x_l = x_ext[7:7 + M, :] * wl_ref[...]                       # x[h, w-1]
    x_r = x_ext[9:9 + M, :] * wr_ref[...]                       # x[h, w+1]

    acc1 = jnp.dot(x_l, w1_ref[0], preferred_element_type=jnp.float32)
    acc1 = acc1 + jnp.dot(x_all, w1_ref[1], preferred_element_type=jnp.float32)
    acc1 = acc1 + jnp.dot(x_r, w1_ref[2], preferred_element_type=jnp.float32)
    y = _silu(acc1 * s1_ref[...] + b1_ref[...])                 # (M, Chid), stays in VMEM

    # Halo rows that fall outside the image implement cv2's zero padding.
    top_keep = (i > 0).astype(jnp.float32)
    bot_keep = (i < last).astype(jnp.float32)
    y = jnp.concatenate([y[:W] * top_keep,
                         y[W:THW + W],
                         y[THW + W:] * bot_keep], axis=0)

    # ---- cv2: 3x1 conv along H + folded BN + SiLU (3 MXU matmuls) ----------
    acc2 = jnp.dot(y[0:THW], w2_ref[0], preferred_element_type=jnp.float32)
    acc2 = acc2 + jnp.dot(y[W:THW + W], w2_ref[1],
                          preferred_element_type=jnp.float32)
    acc2 = acc2 + jnp.dot(y[2 * W:THW + 2 * W], w2_ref[2],
                          preferred_element_type=jnp.float32)
    z = _silu(acc2 * s2_ref[...] + b2_ref[...])                 # (THW, Cout)

    o_ref[0] = z.astype(o_ref.dtype)


# ---------------------------------------------------------------------------
# Tile-size heuristic: largest H divisor whose fused working set stays small
# (conservative for v7x's 64 MiB VMEM; Pallas double-buffers HBM blocks).
# ---------------------------------------------------------------------------
def _pick_block_h(H, W, Cin, Chid, Cout, budget_bytes=2 * 1024 * 1024):
    best = 1
    for th in range(1, H + 1):
        if H % th:
            continue
        m = (th + 2) * W
        work = 4 * (3 * m * Cin + m * Chid + th * W * Cout)   # f32 values
        if work <= budget_bytes:
            best = th
    return best


# ---------------------------------------------------------------------------
# Wrapper (PyTorch NCHW boundary; layout glue only)
# ---------------------------------------------------------------------------
def cross_conv_forward(x_nchw, params, *, block_h=None, shortcut=False):
    w1, s1, b1, w2, s2, b2 = params
    N, Cin, H, W = x_nchw.shape
    Chid = w1.shape[2]
    Cout = w2.shape[2]

    # TODO(synk): only the CrossConv defaults are implemented (stride=1,
    # groups=1, dilation=1); strided / grouped cv1/cv2 variants are not.
    if W % 8:
        raise ValueError("W must be a multiple of 8 for the flattened layout")

    TH = block_h if block_h is not None else _pick_block_h(H, W, Cin, Chid, Cout)
    if H % TH:
        raise ValueError(f"block_h={TH} must divide H={H}")
    nH = H // TH
    THW = TH * W
    M = (TH + 2) * W

    # NCHW -> (N, H*W, C): channels on the 128-lane axis, spatial flattened so
    # every in-kernel op is 2-D.  (Boundary transposes are PyTorch-layout glue;
    # an NHWC pipeline would drop them.)
    x = jnp.transpose(x_nchw, (0, 2, 3, 1)).reshape(N, H * W, Cin)
    x = x.astype(jnp.float32)

    # Hoisted W-edge masks for the 1x3 conv.
    col = jnp.arange(M, dtype=jnp.int32) % W
    wl_mask = (col != 0).astype(jnp.float32)[:, None]          # (M, 1)
    wr_mask = (col != W - 1).astype(jnp.float32)[:, None]

    s1c = s1.reshape(1, Chid).astype(jnp.float32)
    b1c = b1.reshape(1, Chid).astype(jnp.float32)
    s2c = s2.reshape(1, Cout).astype(jnp.float32)
    b2c = b2.reshape(1, Cout).astype(jnp.float32)

    # Halo rows are fetched as 1-row blocks of the same array with clamped
    # index maps; the clamp at the image border is masked to zero in-kernel.
    top_map = lambda n, i: (n, jnp.maximum(i * TH - 1, 0), 0)
    mid_map = lambda n, i: (n, i, 0)
    bot_map = lambda n, i: (n, jnp.minimum((i + 1) * TH, H - 1), 0)
    rep2 = lambda n, i: (0, 0)
    rep3 = lambda n, i: (0, 0, 0)

    out_flat = pl.pallas_call(
        crossconv_kernel,
        out_shape=jax.ShapeDtypeStruct((N, H * W, Cout), jnp.float32),
        grid=(N, nH),
        in_specs=[
            pl.BlockSpec((1, W, Cin), top_map),      # x: row above the tile
            pl.BlockSpec((1, THW, Cin), mid_map),    # x: tile rows
            pl.BlockSpec((1, W, Cin), bot_map),      # x: row below the tile
            pl.BlockSpec((M, 1), rep2),              # wl_mask
            pl.BlockSpec((M, 1), rep2),              # wr_mask
            pl.BlockSpec((3, Cin, Chid), rep3),      # w1 taps
            pl.BlockSpec((1, Chid), rep2),           # s1
            pl.BlockSpec((1, Chid), rep2),           # b1
            pl.BlockSpec((3, Chid, Cout), rep3),     # w2 taps
            pl.BlockSpec((1, Cout), rep2),           # s2
            pl.BlockSpec((1, Cout), rep2),           # b2
        ],
        out_specs=pl.BlockSpec((1, THW, Cout), mid_map),
        compiler_params=pltpu.CompilerParams(
            dimension_semantics=("parallel", "parallel"),
            vmem_limit_bytes=32 * 1024 * 1024,
        ),
    )(x, x, x, wl_mask, wr_mask, w1, s1c, b1c, w2, s2c, b2c)

    out = jnp.transpose(out_flat.reshape(N, H, W, Cout), (0, 3, 1, 2))
    if shortcut and Cin == Cout:        # module: self.add
        out = out + x_nchw
    return out


# ---------------------------------------------------------------------------
# Deterministic synthetic parameters (matches nn.Module shapes, BN folded)
# ---------------------------------------------------------------------------
def make_crossconv_params(key, in_channel, out_channel, expansion=1.0):
    hidden = int(out_channel * expansion)
    ks = jax.random.split(key, 10)
    eps = 1e-5

    # cv1: Conv2d(in, hidden, (1,3), bias=False) -> torch weight (hidden, in, 1, 3)
    w1_t = jax.random.normal(ks[0], (hidden, in_channel, 1, 3), jnp.float32) * 0.1
    w1 = jnp.transpose(w1_t[:, :, 0, :], (2, 1, 0))            # (3, Cin, Chid)
    g1 = 1.0 + 0.1 * jax.random.normal(ks[1], (hidden,), jnp.float32)
    be1 = 0.1 * jax.random.normal(ks[2], (hidden,), jnp.float32)
    mu1 = 0.1 * jax.random.normal(ks[3], (hidden,), jnp.float32)
    var1 = jnp.abs(jax.random.normal(ks[4], (hidden,), jnp.float32)) + 0.5
    s1 = g1 / jnp.sqrt(var1 + eps)
    b1 = be1 - mu1 * s1

    # cv2: Conv2d(hidden, out, (3,1), bias=False) -> torch weight (out, hidden, 3, 1)
    w2_t = jax.random.normal(ks[5], (out_channel, hidden, 3, 1), jnp.float32) * 0.1
    w2 = jnp.transpose(w2_t[:, :, :, 0], (2, 1, 0))            # (3, Chid, Cout)
    g2 = 1.0 + 0.1 * jax.random.normal(ks[6], (out_channel,), jnp.float32)
    be2 = 0.1 * jax.random.normal(ks[7], (out_channel,), jnp.float32)
    mu2 = 0.1 * jax.random.normal(ks[8], (out_channel,), jnp.float32)
    var2 = jnp.abs(jax.random.normal(ks[9], (out_channel,), jnp.float32)) + 0.5
    s2 = g2 / jnp.sqrt(var2 + eps)
    b2 = be2 - mu2 * s2

    return (w1, s1, b1, w2, s2, b2)


# ---------------------------------------------------------------------------
# Pure-JAX reference (lax convs, NCHW) for correctness check
# ---------------------------------------------------------------------------
def cross_conv_reference(x_nchw, params, shortcut=False):
    w1, s1, b1, w2, s2, b2 = params
    Cin = x_nchw.shape[1]
    Cout = w2.shape[2]
    w1_oihw = jnp.transpose(w1, (2, 1, 0))[:, :, None, :]      # (Chid, Cin, 1, 3)
    w2_oihw = jnp.transpose(w2, (2, 1, 0))[:, :, :, None]      # (Cout, Chid, 3, 1)

    y = lax.conv_general_dilated(x_nchw, w1_oihw, (1, 1), ((0, 0), (1, 1)),
                                 dimension_numbers=('NCHW', 'OIHW', 'NCHW'))
    y = _silu(y * s1[None, :, None, None] + b1[None, :, None, None])
    z = lax.conv_general_dilated(y, w2_oihw, (1, 1), ((1, 1), (0, 0)),
                                 dimension_numbers=('NCHW', 'OIHW', 'NCHW'))
    z = _silu(z * s2[None, :, None, None] + b2[None, :, None, None])
    if shortcut and Cin == Cout:
        z = z + x_nchw
    return z


if __name__ == "__main__":
    key = jax.random.PRNGKey(0)
    kx, kp = jax.random.split(key)

    N, C_in, H, W = 2, 4, 16, 16
    C_out = 8                      # hidden = 8 (expansion = 1.0)

    x = jax.random.normal(kx, (N, C_in, H, W), jnp.float32)
    params = make_crossconv_params(kp, C_in, C_out)

    ref = jax.block_until_ready(cross_conv_reference(x, params))

    # Multi-block grid (exercises the interior H-halo path: grid = (2, 2)).
    out = jax.block_until_ready(cross_conv_forward(x, params, block_h=8))
    assert out.shape == (N, C_out, H, W), out.shape
    assert jnp.allclose(out, ref, atol=1e-4, rtol=1e-4), (
        float(jnp.max(jnp.abs(out - ref))))

    # Auto tile size (single H block per image).
    out2 = jax.block_until_ready(cross_conv_forward(x, params))
    assert jnp.allclose(out2, ref, atol=1e-4, rtol=1e-4), (
        float(jnp.max(jnp.abs(out2 - ref))))

    print("KERNEL_OK")
</pallas_src>

<mosaic_0001>
module attributes {stable_mosaic.version = 11 : i64} {
  func.func @crossconv_kernel(%arg0: i32, %arg1: i32, %arg2: memref<1x16x4xf32, #tpu.memory_space<vmem>>, %arg3: memref<1x128x4xf32, #tpu.memory_space<vmem>>, %arg4: memref<1x16x4xf32, #tpu.memory_space<vmem>>, %arg5: memref<160x1xf32, #tpu.memory_space<vmem>>, %arg6: memref<160x1xf32, #tpu.memory_space<vmem>>, %arg7: memref<3x4x8xf32, #tpu.memory_space<vmem>>, %arg8: memref<1x8xf32, #tpu.memory_space<vmem>>, %arg9: memref<1x8xf32, #tpu.memory_space<vmem>>, %arg10: memref<3x8x8xf32, #tpu.memory_space<vmem>>, %arg11: memref<1x8xf32, #tpu.memory_space<vmem>>, %arg12: memref<1x8xf32, #tpu.memory_space<vmem>>, %arg13: memref<1x128x8xf32, #tpu.memory_space<vmem>>) attributes {dimension_semantics = [#tpu.dimension_semantics<parallel>, #tpu.dimension_semantics<parallel>], iteration_bounds = array<i64: 2, 2>, scalar_prefetch = 0 : i64, scratch_operands = 0 : i64, tpu.core_type = #tpu.core_type<tc>, window_params = [{transform_indices = @transform_0, window_bounds = array<i64: 1, 16, 4>}, {transform_indices = @transform_1, window_bounds = array<i64: 1, 128, 4>}, {transform_indices = @transform_2, window_bounds = array<i64: 1, 16, 4>}, {pipeline_mode = #tpu.pipeline_mode<synchronous>, transform_indices = @transform_3, window_bounds = array<i64: 160, 1>}, {pipeline_mode = #tpu.pipeline_mode<synchronous>, transform_indices = @transform_4, window_bounds = array<i64: 160, 1>}, {pipeline_mode = #tpu.pipeline_mode<synchronous>, transform_indices = @transform_5, window_bounds = array<i64: 3, 4, 8>}, {pipeline_mode = #tpu.pipeline_mode<synchronous>, transform_indices = @transform_6, window_bounds = array<i64: 1, 8>}, {pipeline_mode = #tpu.pipeline_mode<synchronous>, transform_indices = @transform_7, window_bounds = array<i64: 1, 8>}, {pipeline_mode = #tpu.pipeline_mode<synchronous>, transform_indices = @transform_8, window_bounds = array<i64: 3, 8, 8>}, {pipeline_mode = #tpu.pipeline_mode<synchronous>, transform_indices = @transform_9, window_bounds = array<i64: 1, 8>}, {pipeline_mode = #tpu.pipeline_mode<synchronous>, transform_indices = @transform_10, window_bounds = array<i64: 1, 8>}, {transform_indices = @transform_11, window_bounds = array<i64: 1, 128, 8>}]} {
    %c0 = arith.constant 0 : index
    %c0_0 = arith.constant 0 : index
    %c0_1 = arith.constant 0 : index
    %0 = vector.load %arg2[%c0, %c0_0, %c0_1] : memref<1x16x4xf32, #tpu.memory_space<vmem>>, vector<1x16x4xf32>
    %1 = vector.shape_cast %0 : vector<1x16x4xf32> to vector<16x4xf32>
    %c0_2 = arith.constant 0 : index
    %c0_3 = arith.constant 0 : index
    %c0_4 = arith.constant 0 : index
    %2 = vector.load %arg3[%c0_2, %c0_3, %c0_4] : memref<1x128x4xf32, #tpu.memory_space<vmem>>, vector<1x128x4xf32>
    %3 = vector.shape_cast %2 : vector<1x128x4xf32> to vector<128x4xf32>
    %c0_5 = arith.constant 0 : index
    %c0_6 = arith.constant 0 : index
    %c0_7 = arith.constant 0 : index
    %4 = vector.load %arg4[%c0_5, %c0_6, %c0_7] : memref<1x16x4xf32, #tpu.memory_space<vmem>>, vector<1x16x4xf32>
    %5 = vector.shape_cast %4 : vector<1x16x4xf32> to vector<16x4xf32>
    %6 = tpu.concatenate %1, %3, %5 in 0 : vector<16x4xf32>, vector<128x4xf32>, vector<16x4xf32> -> vector<160x4xf32>
    %cst = arith.constant 0.000000e+00 : f32
    %7 = vector.broadcast %cst : f32 to vector<8x4xf32>
    %8 = tpu.concatenate %7, %6, %7 in 0 : vector<8x4xf32>, vector<160x4xf32>, vector<8x4xf32> -> vector<176x4xf32>
    %9 = vector.extract_strided_slice %8 {offsets = [7, 0], sizes = [160, 4], strides = [1, 1]} : vector<176x4xf32> to vector<160x4xf32>
    %c0_8 = arith.constant 0 : index
    %c0_9 = arith.constant 0 : index
    %10 = vector.load %arg5[%c0_8, %c0_9] : memref<160x1xf32, #tpu.memory_space<vmem>>, vector<160x1xf32>
    %11 = vector.broadcast %10 : vector<160x1xf32> to vector<160x4xf32>
    %12 = arith.mulf %9, %11 : vector<160x4xf32>
    %13 = vector.extract_strided_slice %8 {offsets = [9, 0], sizes = [160, 4], strides = [1, 1]} : vector<176x4xf32> to vector<160x4xf32>
    %c0_10 = arith.constant 0 : index
    %c0_11 = arith.constant 0 : index
    %14 = vector.load %arg6[%c0_10, %c0_11] : memref<160x1xf32, #tpu.memory_space<vmem>>, vector<160x1xf32>
    %15 = vector.broadcast %14 : vector<160x1xf32> to vector<160x4xf32>
    %16 = arith.mulf %13, %15 : vector<160x4xf32>
    %c0_12 = arith.constant 0 : index
    %c0_13 = arith.constant 0 : index
    %c0_14 = arith.constant 0 : index
    %17 = vector.load %arg7[%c0_12, %c0_13, %c0_14] : memref<3x4x8xf32, #tpu.memory_space<vmem>>, vector<1x4x8xf32>
    %18 = vector.shape_cast %17 : vector<1x4x8xf32> to vector<4x8xf32>
    %cst_15 = arith.constant dense<0.000000e+00> : vector<160x8xf32>
    %19 = tpu.matmul %12, %18, %cst_15 {dimension_numbers = #tpu.dot_dimension_numbers<[1], [0], [0], [1], [0, 0, 1, 1], [], []>} : vector<160x4xf32>, vector<4x8xf32>, vector<160x8xf32> -> vector<160x8xf32>
    %c1 = arith.constant 1 : index
    %c0_16 = arith.constant 0 : index
    %c0_17 = arith.constant 0 : index
    %20 = vector.load %arg7[%c1, %c0_16, %c0_17] : memref<3x4x8xf32, #tpu.memory_space<vmem>>, vector<1x4x8xf32>
    %21 = vector.shape_cast %20 : vector<1x4x8xf32> to vector<4x8xf32>
    %cst_18 = arith.constant dense<0.000000e+00> : vector<160x8xf32>
    %22 = tpu.matmul %6, %21, %cst_18 {dimension_numbers = #tpu.dot_dimension_numbers<[1], [0], [0], [1], [0, 0, 1, 1], [], []>} : vector<160x4xf32>, vector<4x8xf32>, vector<160x8xf32> -> vector<160x8xf32>
    %23 = arith.addf %19, %22 : vector<160x8xf32>
    %c2 = arith.constant 2 : index
    %c0_19 = arith.constant 0 : index
    %c0_20 = arith.constant 0 : index
    %24 = vector.load %arg7[%c2, %c0_19, %c0_20] : memref<3x4x8xf32, #tpu.memory_space<vmem>>, vector<1x4x8xf32>
    %25 = vector.shape_cast %24 : vector<1x4x8xf32> to vector<4x8xf32>
    %cst_21 = arith.constant dense<0.000000e+00> : vector<160x8xf32>
    %26 = tpu.matmul %16, %25, %cst_21 {dimension_numbers = #tpu.dot_dimension_numbers<[1], [0], [0], [1], [0, 0, 1, 1], [], []>} : vector<160x4xf32>, vector<4x8xf32>, vector<160x8xf32> -> vector<160x8xf32>
    %27 = arith.addf %23, %26 : vector<160x8xf32>
    %c0_22 = arith.constant 0 : index
    %c0_23 = arith.constant 0 : index
    %28 = vector.load %arg8[%c0_22, %c0_23] : memref<1x8xf32, #tpu.memory_space<vmem>>, vector<1x8xf32>
    %29 = vector.broadcast %28 : vector<1x8xf32> to vector<160x8xf32>
    %30 = arith.mulf %27, %29 : vector<160x8xf32>
    %c0_24 = arith.constant 0 : index
    %c0_25 = arith.constant 0 : index
    %31 = vector.load %arg9[%c0_24, %c0_25] : memref<1x8xf32, #tpu.memory_space<vmem>>, vector<1x8xf32>
    %32 = vector.broadcast %31 : vector<1x8xf32> to vector<160x8xf32>
    %33 = arith.addf %30, %32 : vector<160x8xf32>
    %34 = arith.negf %33 : vector<160x8xf32>
    %35 = math.exp %34 : vector<160x8xf32>
    %cst_26 = arith.constant 1.000000e+00 : f32
    %36 = vector.broadcast %cst_26 : f32 to vector<160x8xf32>
    %37 = arith.addf %36, %35 : vector<160x8xf32>
    %38 = arith.divf %36, %37 : vector<160x8xf32>
    %39 = arith.mulf %33, %38 : vector<160x8xf32>
    %c0_i32 = arith.constant 0 : i32
    %40 = arith.cmpi sgt, %arg1, %c0_i32 : i32
    %41 = arith.extui %40 : i1 to i32
    %42 = arith.sitofp %41 : i32 to f32
    %c1_i32 = arith.constant 1 : i32
    %43 = arith.cmpi slt, %arg1, %c1_i32 : i32
    %44 = arith.extui %43 : i1 to i32
    %45 = arith.sitofp %44 : i32 to f32
    %46 = vector.extract_strided_slice %39 {offsets = [0, 0], sizes = [16, 8], strides = [1, 1]} : vector<160x8xf32> to vector<16x8xf32>
    %47 = vector.broadcast %42 : f32 to vector<16x8xf32>
    %48 = arith.mulf %46, %47 : vector<16x8xf32>
    %49 = vector.extract_strided_slice %39 {offsets = [16, 0], sizes = [128, 8], strides = [1, 1]} : vector<160x8xf32> to vector<128x8xf32>
    %50 = vector.extract_strided_slice %39 {offsets = [144, 0], sizes = [16, 8], strides = [1, 1]} : vector<160x8xf32> to vector<16x8xf32>
    %51 = vector.broadcast %45 : f32 to vector<16x8xf32>
    %52 = arith.mulf %50, %51 : vector<16x8xf32>
    %53 = tpu.concatenate %48, %49, %52 in 0 : vector<16x8xf32>, vector<128x8xf32>, vector<16x8xf32> -> vector<160x8xf32>
    %54 = vector.extract_strided_slice %53 {offsets = [0, 0], sizes = [128, 8], strides = [1, 1]} : vector<160x8xf32> to vector<128x8xf32>
    %c0_27 = arith.constant 0 : index
    %c0_28 = arith.constant 0 : index
    %c0_29 = arith.constant 0 : index
    %55 = vector.load %arg10[%c0_27, %c0_28, %c0_29] : memref<3x8x8xf32, #tpu.memory_space<vmem>>, vector<1x8x8xf32>
    %56 = vector.shape_cast %55 : vector<1x8x8xf32> to vector<8x8xf32>
    %cst_30 = arith.constant dense<0.000000e+00> : vector<128x8xf32>
    %57 = tpu.matmul %54, %56, %cst_30 {dimension_numbers = #tpu.dot_dimension_numbers<[1], [0], [0], [1], [0, 0, 1, 1], [], []>} : vector<128x8xf32>, vector<8x8xf32>, vector<128x8xf32> -> vector<128x8xf32>
    %58 = vector.extract_strided_slice %53 {offsets = [16, 0], sizes = [128, 8], strides = [1, 1]} : vector<160x8xf32> to vector<128x8xf32>
    %c1_31 = arith.constant 1 : index
    %c0_32 = arith.constant 0 : index
    %c0_33 = arith.constant 0 : index
    %59 = vector.load %arg10[%c1_31, %c0_32, %c0_33] : memref<3x8x8xf32, #tpu.memory_space<vmem>>, vector<1x8x8xf32>
    %60 = vector.shape_cast %59 : vector<1x8x8xf32> to vector<8x8xf32>
    %cst_34 = arith.constant dense<0.000000e+00> : vector<128x8xf32>
    %61 = tpu.matmul %58, %60, %cst_34 {dimension_numbers = #tpu.dot_dimension_numbers<[1], [0], [0], [1], [0, 0, 1, 1], [], []>} : vector<128x8xf32>, vector<8x8xf32>, vector<128x8xf32> -> vector<128x8xf32>
    %62 = arith.addf %57, %61 : vector<128x8xf32>
    %63 = vector.extract_strided_slice %53 {offsets = [32, 0], sizes = [128, 8], strides = [1, 1]} : vector<160x8xf32> to vector<128x8xf32>
    %c2_35 = arith.constant 2 : index
    %c0_36 = arith.constant 0 : index
    %c0_37 = arith.constant 0 : index
    %64 = vector.load %arg10[%c2_35, %c0_36, %c0_37] : memref<3x8x8xf32, #tpu.memory_space<vmem>>, vector<1x8x8xf32>
    %65 = vector.shape_cast %64 : vector<1x8x8xf32> to vector<8x8xf32>
    %cst_38 = arith.constant dense<0.000000e+00> : vector<128x8xf32>
    %66 = tpu.matmul %63, %65, %cst_38 {dimension_numbers = #tpu.dot_dimension_numbers<[1], [0], [0], [1], [0, 0, 1, 1], [], []>} : vector<128x8xf32>, vector<8x8xf32>, vector<128x8xf32> -> vector<128x8xf32>
    %67 = arith.addf %62, %66 : vector<128x8xf32>
    %c0_39 = arith.constant 0 : index
    %c0_40 = arith.constant 0 : index
    %68 = vector.load %arg11[%c0_39, %c0_40] : memref<1x8xf32, #tpu.memory_space<vmem>>, vector<1x8xf32>
    %69 = vector.broadcast %68 : vector<1x8xf32> to vector<128x8xf32>
    %70 = arith.mulf %67, %69 : vector<128x8xf32>
    %c0_41 = arith.constant 0 : index
    %c0_42 = arith.constant 0 : index
    %71 = vector.load %arg12[%c0_41, %c0_42] : memref<1x8xf32, #tpu.memory_space<vmem>>, vector<1x8xf32>
    %72 = vector.broadcast %71 : vector<1x8xf32> to vector<128x8xf32>
    %73 = arith.addf %70, %72 : vector<128x8xf32>
    %74 = arith.negf %73 : vector<128x8xf32>
    %75 = math.exp %74 : vector<128x8xf32>
    %cst_43 = arith.constant 1.000000e+00 : f32
    %76 = vector.broadcast %cst_43 : f32 to vector<128x8xf32>
    %77 = arith.addf %76, %75 : vector<128x8xf32>
    %78 = arith.divf %76, %77 : vector<128x8xf32>
    %79 = arith.mulf %73, %78 : vector<128x8xf32>
    %c0_44 = arith.constant 0 : index
    %c0_45 = arith.constant 0 : index
    %c0_46 = arith.constant 0 : index
    %80 = vector.load %arg13[%c0_44, %c0_45, %c0_46] : memref<1x128x8xf32, #tpu.memory_space<vmem>>, vector<1x128x8xf32>
    %81 = vector.shape_cast %80 : vector<1x128x8xf32> to vector<128x8xf32>
    %82 = vector.shape_cast %79 : vector<128x8xf32> to vector<1x128x8xf32>
    tpu.vector_store %arg13[%c0_44, %c0_45, %c0_46], %82 {strides = array<i32>} : memref<1x128x8xf32, #tpu.memory_space<vmem>>, vector<1x128x8xf32>,
    return
  }
  func.func @transform_0(%arg0: i32, %arg1: i32) -> (i32, i32, i32) {
    %c8_i32 = arith.constant 8 : i32
    %0 = arith.muli %arg1, %c8_i32 : i32
    %c1_i32 = arith.constant 1 : i32
    %1 = arith.subi %0, %c1_i32 : i32
    %c0_i32 = arith.constant 0 : i32
    %2 = arith.maxsi %1, %c0_i32 : i32
    %c0_i32_0 = arith.constant 0 : i32
    %c0_i32_1 = arith.constant 0 : i32
    return %arg0, %2, %c0_i32_0 : i32, i32, i32
  }
  func.func @transform_1(%arg0: i32, %arg1: i32) -> (i32, i32, i32) {
    %c0_i32 = arith.constant 0 : i32
    %c0_i32_0 = arith.constant 0 : i32
    return %arg0, %arg1, %c0_i32 : i32, i32, i32
  }
  func.func @transform_2(%arg0: i32, %arg1: i32) -> (i32, i32, i32) {
    %c1_i32 = arith.constant 1 : i32
    %0 = arith.addi %arg1, %c1_i32 : i32
    %c8_i32 = arith.constant 8 : i32
    %1 = arith.muli %0, %c8_i32 : i32
    %c15_i32 = arith.constant 15 : i32
    %2 = arith.minsi %1, %c15_i32 : i32
    %c0_i32 = arith.constant 0 : i32
    %c0_i32_0 = arith.constant 0 : i32
    return %arg0, %2, %c0_i32 : i32, i32, i32
  }
  func.func @transform_3(%arg0: i32, %arg1: i32) -> (i32, i32) {
    %c0_i32 = arith.constant 0 : i32
    %c0_i32_0 = arith.constant 0 : i32
    %c0_i32_1 = arith.constant 0 : i32
    return %c0_i32, %c0_i32_0 : i32, i32
  }
  func.func @transform_4(%arg0: i32, %arg1: i32) -> (i32, i32) {
    %c0_i32 = arith.constant 0 : i32
    %c0_i32_0 = arith.constant 0 : i32
    %c0_i32_1 = arith.constant 0 : i32
    return %c0_i32, %c0_i32_0 : i32, i32
  }
  func.func @transform_5(%arg0: i32, %arg1: i32) -> (i32, i32, i32) {
    %c0_i32 = arith.constant 0 : i32
    %c0_i32_0 = arith.constant 0 : i32
    %c0_i32_1 = arith.constant 0 : i32
    %c0_i32_2 = arith.constant 0 : i32
    return %c0_i32, %c0_i32_0, %c0_i32_1 : i32, i32, i32
  }
  func.func @transform_6(%arg0: i32, %arg1: i32) -> (i32, i32) {
    %c0_i32 = arith.constant 0 : i32
    %c0_i32_0 = arith.constant 0 : i32
    %c0_i32_1 = arith.constant 0 : i32
    return %c0_i32, %c0_i32_0 : i32, i32
  }
  func.func @transform_7(%arg0: i32, %arg1: i32) -> (i32, i32) {
    %c0_i32 = arith.constant 0 : i32
    %c0_i32_0 = arith.constant 0 : i32
    %c0_i32_1 = arith.constant 0 : i32
    return %c0_i32, %c0_i32_0 : i32, i32
  }
  func.func @transform_8(%arg0: i32, %arg1: i32) -> (i32, i32, i32) {
    %c0_i32 = arith.constant 0 : i32
    %c0_i32_0 = arith.constant 0 : i32
    %c0_i32_1 = arith.constant 0 : i32
    %c0_i32_2 = arith.constant 0 : i32
    return %c0_i32, %c0_i32_0, %c0_i32_1 : i32, i32, i32
  }
  func.func @transform_9(%arg0: i32, %arg1: i32) -> (i32, i32) {
    %c0_i32 = arith.constant 0 : i32
    %c0_i32_0 = arith.constant 0 : i32
    %c0_i32_1 = arith.constant 0 : i32
    return %c0_i32, %c0_i32_0 : i32, i32
  }
  func.func @transform_10(%arg0: i32, %arg1: i32) -> (i32, i32) {
    %c0_i32 = arith.constant 0 : i32
    %c0_i32_0 = arith.constant 0 : i32
    %c0_i32_1 = arith.constant 0 : i32
    return %c0_i32, %c0_i32_0 : i32, i32
  }
  func.func @transform_11(%arg0: i32, %arg1: i32) -> (i32, i32, i32) {
    %c0_i32 = arith.constant 0 : i32
    %c0_i32_0 = arith.constant 0 : i32
    return %arg0, %arg1, %c0_i32 : i32, i32, i32
  }
}

</mosaic_0001>

<llo_original>
// kernel: tpu_custom_call.1
$region0: #{tpu_custom_call.1}
  #allocation0 [shape = 'u32[]', space=smem, size = 0x4, offset = 0x4, fixed_abs, tag = 'smem constant byte address 0x4 - core index']
  #allocation1 [shape = 'u32[144,128]{1,0:T(1,128)}', space=vmem, size = 0x12000, scoped, tag = 'internal scratch']
  %s0 = inlined_call_operand.vmem [shape: f32[2,256,4], index: 0, kind: input, shape index: {}]
  %s1 = inlined_call_operand.vmem [shape: f32[2,256,4], index: 1, kind: input, shape index: {}]
  %s2 = inlined_call_operand.vmem [shape: f32[2,256,4], index: 2, kind: input, shape index: {}]
  %s3 = inlined_call_operand.vmem [shape: f32[160,1], index: 3, kind: input, shape index: {}]
  %s4 = inlined_call_operand.vmem [shape: f32[160,1], index: 4, kind: input, shape index: {}]
  %s5 = inlined_call_operand.vmem [shape: f32[3,4,8], index: 5, kind: input, shape index: {}]
  %s6 = inlined_call_operand.vmem [shape: f32[1,8], index: 6, kind: input, shape index: {}]
  %s7 = inlined_call_operand.vmem [shape: f32[1,8], index: 7, kind: input, shape index: {}]
  %s8 = inlined_call_operand.vmem [shape: f32[3,8,8], index: 8, kind: input, shape index: {}]
  %s9 = inlined_call_operand.vmem [shape: f32[1,8], index: 9, kind: input, shape index: {}]
  %s10 = inlined_call_operand.vmem [shape: f32[1,8], index: 10, kind: input, shape index: {}]
  %s11 = inlined_call_operand.vmem [shape: f32[2,256,8], index: 11, kind: output, shape index: {}]
  %s12 = sld [smem:[#allocation0]]
  $region77: #{tpu_custom_call.1} parent=0
    _
  %s14 = ssub.s32 1, %s12
  %s15 = scalar_select 0, %s14, %s12
  loop: start=0, step=1, limit=6
  $region2: #{tpu_custom_call.1} parent=0 // loop_pre_header
    _
  $region3: #{tpu_custom_call.1} parent=0 // loop_header
    %s17 = sphi 0, %s21
    %p18 = scmp.ge.s32.totalorder %s17, 6
    %s24 = sphi 0, %s36
    %s25 = sphi 0, %s32
    %s26 = sphi 0, %s24
    %s27 = sphi 0, %s25
    %s28 = sphi 0, %s26
    %s29 = sphi 0, %s27
    %s49 = sphi 0, %s51
    %s52 = sphi 0, %s49
    %s53 = sphi 0, %s52
    %s69 = sphi 0, %s53
    %s77 = sphi 0, %s79
    %s80 = sphi 0, %s77
    %s81 = sphi 0, %s80
    %s97 = sphi 0, %s81
    %s113 = sphi 0, %s115
    %s116 = sphi 0, %s113
    %s117 = sphi 0, %s116
    %s133 = sphi 0, %s117
    %s137 = sphi 0, %s137
    %s139 = sphi 0, %s137
    %s140 = sphi 0, %s139
    %s154 = sphi 0, %s140
    %s158 = sphi 0, %s158
    %s160 = sphi 0, %s158
    %s161 = sphi 0, %s160
    %s175 = sphi 0, %s161
    %s179 = sphi 0, %s179
    %s181 = sphi 0, %s179
    %s182 = sphi 0, %s181
    %s196 = sphi 0, %s182
    %s200 = sphi 0, %s200
    %s202 = sphi 0, %s200
    %s203 = sphi 0, %s202
    %s217 = sphi 0, %s203
    %s221 = sphi 0, %s221
    %s223 = sphi 0, %s221
    %s224 = sphi 0, %s223
    %s238 = sphi 0, %s224
    %s242 = sphi 0, %s242
    %s244 = sphi 0, %s242
    %s245 = sphi 0, %s244
    %s259 = sphi 0, %s245
    %s263 = sphi 0, %s263
    %s265 = sphi 0, %s263
    %s266 = sphi 0, %s265
    %s280 = sphi 0, %s266
    %s284 = sphi 0, %s284
    %s286 = sphi 0, %s284
    %s287 = sphi 0, %s286
    %s301 = sphi 0, %s287
    %s309 = sphi 0, %s311
    %s312 = sphi 0, %s309
    %s313 = sphi 0, %s312
    %s329 = sphi 0, %s313
  $region4: #{tpu_custom_call.1} parent=0 // loop_header_branch
    %20 = sbr.rel (%p18) target = $region8
  $region5: #{tpu_custom_call.1} parent=0 // loop_body
    %s22 = ssub.s32 %s17, 1
    %s23 = ssub.s32 %s17, 2
    %s30 = sadd.s32 1, %s25
    %p31 = scmp.ge.s32.totalorder %s30, 2
    %s32 = scalar_select %p31, 0, %s30
    %s33 = sadd.s32 1, %s24
    %s34 = scalar_select %p31, %s33, %s24
    %p35 = scmp.ge.s32.totalorder %s34, 2
    %s36 = scalar_select %p35, 0, %s34
    %s37 = smul.u32 %s25, 8
    %s38 = ssub.s32 %s37, 1
    %p39 = scmp.gt.s32.totalorder %s38, 0
    %s40 = scalar_select %p39, %s38, 0
    %s41 = smul.u32 %s32, 8
    %s42 = ssub.s32 %s41, 1
    %p43 = scmp.gt.s32.totalorder %s42, 0
    %s44 = scalar_select %p43, %s42, 0
    %s45 = ssub.s32 %s24, %s36
    %s46 = ssub.s32 %s40, %s44
    %s47 = sor.u32 %s45, %s46
    %p48 = scmp.eq.s32.totalorder %s47, 0
    %s50 = sadd.s32 %s49, 1
    %s51 = scalar_select %p48, %s49, %s50
    %p54 = pneg %p48
    %p55 = scmp.eq.s32.totalorder %s17, 3
    %p56 = por %p54, %p55
    %p57 = scmp.ne.s32.totalorder %s49, %s52
    %p58 = scmp.eq.s32.totalorder %s17, 0
    %p59 = por %p57, %p58
    %p60 = scmp.ne.s32.totalorder %s49, %s52
    %p61 = scmp.eq.s32.totalorder %s22, 3
    %p62 = por %p60, %p61
    %p63 = scmp.ne.s32.totalorder %s52, %s53
    %p64 = scmp.eq.s32.totalorder %s22, 0
    %p65 = por %p63, %p64
    %p66 = scmp.ne.s32.totalorder %s52, %s53
    %p67 = scmp.eq.s32.totalorder %s23, 3
    %p68 = por %p66, %p67
    %p70 = scmp.ne.s32.totalorder %s53, %s69
    %p71 = scmp.eq.s32.totalorder %s23, 0
    %p72 = por %p70, %p71
    %s73 = ssub.s32 %s24, %s36
    %s74 = ssub.s32 %s25, %s32
    %s75 = sor.u32 %s73, %s74
    %p76 = scmp.eq.s32.totalorder %s75, 0
    %s78 = sadd.s32 %s77, 1
    %s79 = scalar_select %p76, %s77, %s78
    %p82 = pneg %p76
    %p83 = scmp.eq.s32.totalorder %s17, 3
    %p84 = por %p82, %p83
    %p85 = scmp.ne.s32.totalorder %s77, %s80
    %p86 = scmp.eq.s32.totalorder %s17, 0
    %p87 = por %p85, %p86
    %p88 = scmp.ne.s32.totalorder %s77, %s80
    %p89 = scmp.eq.s32.totalorder %s22, 3
    %p90 = por %p88, %p89
    %p91 = scmp.ne.s32.totalorder %s80, %s81
    %p92 = scmp.eq.s32.totalorder %s22, 0
    %p93 = por %p91, %p92
    %p94 = scmp.ne.s32.totalorder %s80, %s81
    %p95 = scmp.eq.s32.totalorder %s23, 3
    %p96 = por %p94, %p95
    %p98 = scmp.ne.s32.totalorder %s81, %s97
    %p99 = scmp.eq.s32.totalorder %s23, 0
    %p100 = por %p98, %p99
    %s101 = sadd.s32 %s25, 1
    %s102 = smul.u32 %s101, 8
    %p103 = scmp.lt.s32.totalorder %s102, 15
    %s104 = scalar_select %p103, %s102, 15
    %s105 = sadd.s32 %s32, 1
    %s106 = smul.u32 %s105, 8
    %p107 = scmp.lt.s32.totalorder %s106, 15
    %s108 = scalar_select %p107, %s106, 15
    %s109 = ssub.s32 %s24, %s36
    %s110 = ssub.s32 %s104, %s108
    %s111 = sor.u32 %s109, %s110
    %p112 = scmp.eq.s32.totalorder %s111, 0
    %s114 = sadd.s32 %s113, 1
    %s115 = scalar_select %p112, %s113, %s114
    %p118 = pneg %p112
    %p119 = scmp.eq.s32.totalorder %s17, 3
    %p120 = por %p118, %p119
    %p121 = scmp.ne.s32.totalorder %s113, %s116
    %p122 = scmp.eq.s32.totalorder %s17, 0
    %p123 = por %p121, %p122
    %p124 = scmp.ne.s32.totalorder %s113, %s116
    %p125 = scmp.eq.s32.totalorder %s22, 3
    %p126 = por %p124, %p125
    %p127 = scmp.ne.s32.totalorder %s116, %s117
    %p128 = scmp.eq.s32.totalorder %s22, 0
    %p129 = por %p127, %p128
    %p130 = scmp.ne.s32.totalorder %s116, %s117
    %p131 = scmp.eq.s32.totalorder %s23, 3
    %p132 = por %p130, %p131
    %p134 = scmp.ne.s32.totalorder %s117, %s133
    %p135 = scmp.eq.s32.totalorder %s23, 0
    %p136 = por %p134, %p135
    %s138 = sadd.s32 %s137, 1
    %p141 = scmp.eq.s32.totalorder %s17, 3
    %p142 = scmp.ne.s32.totalorder %s137, %s139
    %p143 = scmp.eq.s32.totalorder %s17, 0
    %p144 = por %p142, %p143
    %p145 = scmp.ne.s32.totalorder %s137, %s139
    %p146 = scmp.eq.s32.totalorder %s22, 3
    %p147 = por %p145, %p146
    %p148 = scmp.ne.s32.totalorder %s139, %s140
    %p149 = scmp.eq.s32.totalorder %s22, 0
    %p150 = por %p148, %p149
    %p151 = scmp.ne.s32.totalorder %s139, %s140
    %p152 = scmp.eq.s32.totalorder %s23, 3
    %p153 = por %p151, %p152
    %p155 = scmp.ne.s32.totalorder %s140, %s154
    %p156 = scmp.eq.s32.totalorder %s23, 0
    %p157 = por %p155, %p156
    %s159 = sadd.s32 %s158, 1
    %p162 = scmp.eq.s32.totalorder %s17, 3
    %p163 = scmp.ne.s32.totalorder %s158, %s160
    %p164 = scmp.eq.s32.totalorder %s17, 0
    %p165 = por %p163, %p164
    %p166 = scmp.ne.s32.totalorder %s158, %s160
    %p167 = scmp.eq.s32.totalorder %s22, 3
    %p168 = por %p166, %p167
    %p169 = scmp.ne.s32.totalorder %s160, %s161
    %p170 = scmp.eq.s32.totalorder %s22, 0
    %p171 = por %p169, %p170
    %p172 = scmp.ne.s32.totalorder %s160, %s161
    %p173 = scmp.eq.s32.totalorder %s23, 3
    %p174 = por %p172, %p173
    %p176 = scmp.ne.s32.totalorder %s161, %s175
    %p177 = scmp.eq.s32.totalorder %s23, 0
    %p178 = por %p176, %p177
    %s180 = sadd.s32 %s179, 1
    %p183 = scmp.eq.s32.totalorder %s17, 3
    %p184 = scmp.ne.s32.totalorder %s179, %s181
    %p185 = scmp.eq.s32.totalorder %s17, 0
    %p186 = por %p184, %p185
    %p187 = scmp.ne.s32.totalorder %s179, %s181
    %p188 = scmp.eq.s32.totalorder %s22, 3
    %p189 = por %p187, %p188
    %p190 = scmp.ne.s32.totalorder %s181, %s182
    %p191 = scmp.eq.s32.totalorder %s22, 0
    %p192 = por %p190, %p191
    %p193 = scmp.ne.s32.totalorder %s181, %s182
    %p194 = scmp.eq.s32.totalorder %s23, 3
    %p195 = por %p193, %p194
    %p197 = scmp.ne.s32.totalorder %s182, %s196
    %p198 = scmp.eq.s32.totalorder %s23, 0
    %p199 = por %p197, %p198
    %s201 = sadd.s32 %s200, 1
    %p204 = scmp.eq.s32.totalorder %s17, 3
    %p205 = scmp.ne.s32.totalorder %s200, %s202
    %p206 = scmp.eq.s32.totalorder %s17, 0
    %p207 = por %p205, %p206
    %p208 = scmp.ne.s32.totalorder %s200, %s202
    %p209 = scmp.eq.s32.totalorder %s22, 3
    %p210 = por %p208, %p209
    %p211 = scmp.ne.s32.totalorder %s202, %s203
    %p212 = scmp.eq.s32.totalorder %s22, 0
    %p213 = por %p211, %p212
    %p214 = scmp.ne.s32.totalorder %s202, %s203
    %p215 = scmp.eq.s32.totalorder %s23, 3
    %p216 = por %p214, %p215
    %p218 = scmp.ne.s32.totalorder %s203, %s217
    %p219 = scmp.eq.s32.totalorder %s23, 0
    %p220 = por %p218, %p219
    %s222 = sadd.s32 %s221, 1
    %p225 = scmp.eq.s32.totalorder %s17, 3
    %p226 = scmp.ne.s32.totalorder %s221, %s223
    %p227 = scmp.eq.s32.totalorder %s17, 0
    %p228 = por %p226, %p227
    %p229 = scmp.ne.s32.totalorder %s221, %s223
    %p230 = scmp.eq.s32.totalorder %s22, 3
    %p231 = por %p229, %p230
    %p232 = scmp.ne.s32.totalorder %s223, %s224
    %p233 = scmp.eq.s32.totalorder %s22, 0
    %p234 = por %p232, %p233
    %p235 = scmp.ne.s32.totalorder %s223, %s224
    %p236 = scmp.eq.s32.totalorder %s23, 3
    %p237 = por %p235, %p236
    %p239 = scmp.ne.s32.totalorder %s224, %s238
    %p240 = scmp.eq.s32.totalorder %s23, 0
    %p241 = por %p239, %p240
    %s243 = sadd.s32 %s242, 1
    %p246 = scmp.eq.s32.totalorder %s17, 3
    %p247 = scmp.ne.s32.totalorder %s242, %s244
    %p248 = scmp.eq.s32.totalorder %s17, 0
    %p249 = por %p247, %p248
    %p250 = scmp.ne.s32.totalorder %s242, %s244
    %p251 = scmp.eq.s32.totalorder %s22, 3
    %p252 = por %p250, %p251
    %p253 = scmp.ne.s32.totalorder %s244, %s245
    %p254 = scmp.eq.s32.totalorder %s22, 0
    %p255 = por %p253, %p254
    %p256 = scmp.ne.s32.totalorder %s244, %s245
    %p257 = scmp.eq.s32.totalorder %s23, 3
    %p258 = por %p256, %p257
    %p260 = scmp.ne.s32.totalorder %s245, %s259
    %p261 = scmp.eq.s32.totalorder %s23, 0
    %p262 = por %p260, %p261
    %s264 = sadd.s32 %s263, 1
    %p267 = scmp.eq.s32.totalorder %s17, 3
    %p268 = scmp.ne.s32.totalorder %s263, %s265
    %p269 = scmp.eq.s32.totalorder %s17, 0
    %p270 = por %p268, %p269
    %p271 = scmp.ne.s32.totalorder %s263, %s265
    %p272 = scmp.eq.s32.totalorder %s22, 3
    %p273 = por %p271, %p272
    %p274 = scmp.ne.s32.totalorder %s265, %s266
    %p275 = scmp.eq.s32.totalorder %s22, 0
    %p276 = por %p274, %p275
    %p277 = scmp.ne.s32.totalorder %s265, %s266
    %p278 = scmp.eq.s32.totalorder %s23, 3
    %p279 = por %p277, %p278
    %p281 = scmp.ne.s32.totalorder %s266, %s280
    %p282 = scmp.eq.s32.totalorder %s23, 0
    %p283 = por %p281, %p282
    %s285 = sadd.s32 %s284, 1
    %p288 = scmp.eq.s32.totalorder %s17, 3
    %p289 = scmp.ne.s32.totalorder %s284, %s286
    %p290 = scmp.eq.s32.totalorder %s17, 0
    %p291 = por %p289, %p290
    %p292 = scmp.ne.s32.totalorder %s284, %s286
    %p293 = scmp.eq.s32.totalorder %s22, 3
    %p294 = por %p292, %p293
    %p295 = scmp.ne.s32.totalorder %s286, %s287
    %p296 = scmp.eq.s32.totalorder %s22, 0
    %p297 = por %p295, %p296
    %p298 = scmp.ne.s32.totalorder %s286, %s287
    %p299 = scmp.eq.s32.totalorder %s23, 3
    %p300 = por %p298, %p299
    %p302 = scmp.ne.s32.totalorder %s287, %s301
    %p303 = scmp.eq.s32.totalorder %s23, 0
    %p304 = por %p302, %p303
    %s305 = ssub.s32 %s24, %s36
    %s306 = ssub.s32 %s25, %s32
    %s307 = sor.u32 %s305, %s306
    %p308 = scmp.eq.s32.totalorder %s307, 0
    %s310 = sadd.s32 %s309, 1
    %s311 = scalar_select %p308, %s309, %s310
    %p314 = pneg %p308
    %p315 = scmp.eq.s32.totalorder %s17, 3
    %p316 = por %p314, %p315
    %p317 = scmp.ne.s32.totalorder %s309, %s312
    %p318 = scmp.eq.s32.totalorder %s17, 0
    %p319 = por %p317, %p318
    %p320 = scmp.ne.s32.totalorder %s309, %s312
    %p321 = scmp.eq.s32.totalorder %s22, 3
    %p322 = por %p320, %p321
    %p323 = scmp.ne.s32.totalorder %s312, %s313
    %p324 = scmp.eq.s32.totalorder %s22, 0
    %p325 = por %p323, %p324
    %p326 = scmp.ne.s32.totalorder %s312, %s313
    %p327 = scmp.eq.s32.totalorder %s23, 3
    %p328 = por %p326, %p327
    %p330 = scmp.ne.s32.totalorder %s313, %s329
    %p331 = scmp.eq.s32.totalorder %s23, 0
    %p332 = por %p330, %p331
    %p333 = scmp.le.s32.totalorder 1, %s17
    %p334 = scmp.lt.s32.totalorder %s17, 5
    %p335 = pnand %p333, %p334
    %p336 = pneg %p335
    // Predicated region
    $region9: #{tpu_custom_call.1} parent=5 // pred_check
      _
    $region10: #{tpu_custom_call.1} parent=5 // pred_check_branch
      %338 = sbr.rel (%p335) target = $region12
    $region11: #{tpu_custom_call.1} parent=5 // pred_region
      %s339 = ssub.s32 %s17, 1
      // Predicated region
      $region13: #{tpu_custom_call.1} parent=11 // pred_check
        %p340 = pneg %p150
      $region14: #{tpu_custom_call.1} parent=11 // pred_check_branch
        %342 = sbr.rel (%p340) target = $region16
      $region15: #{tpu_custom_call.1} parent=11 // pred_region
        _
      $region16: #{tpu_custom_call.1} parent=11 // pred_fallthru
        _
      // Predicated region
      $region17: #{tpu_custom_call.1} parent=11 // pred_check
        %p343 = pneg %p171
      $region18: #{tpu_custom_call.1} parent=11 // pred_check_branch
        %345 = sbr.rel (%p343) target = $region20
      $region19: #{tpu_custom_call.1} parent=11 // pred_region
        _
      $region20: #{tpu_custom_call.1} parent=11 // pred_fallthru
        _
      // Predicated region
      $region21: #{tpu_custom_call.1} parent=11 // pred_check
        %p346 = pneg %p192
      $region22: #{tpu_custom_call.1} parent=11 // pred_check_branch
        %348 = sbr.rel (%p346) target = $region24
      $region23: #{tpu_custom_call.1} parent=11 // pred_region
        _
      $region24: #{tpu_custom_call.1} parent=11 // pred_fallthru
        _
      // Predicated region
      $region25: #{tpu_custom_call.1} parent=11 // pred_check
        %p349 = pneg %p213
      $region26: #{tpu_custom_call.1} parent=11 // pred_check_branch
        %351 = sbr.rel (%p349) target = $region28
      $region27: #{tpu_custom_call.1} parent=11 // pred_region
        _
      $region28: #{tpu_custom_call.1} parent=11 // pred_fallthru
        _
      // Predicated region
      $region29: #{tpu_custom_call.1} parent=11 // pred_check
        %p352 = pneg %p234
      $region30: #{tpu_custom_call.1} parent=11 // pred_check_branch
        %354 = sbr.rel (%p352) target = $region32
      $region31: #{tpu_custom_call.1} parent=11 // pred_region
        _
      $region32: #{tpu_custom_call.1} parent=11 // pred_fallthru
        _
      // Predicated region
      $region33: #{tpu_custom_call.1} parent=11 // pred_check
        %p355 = pneg %p255
      $region34: #{tpu_custom_call.1} parent=11 // pred_check_branch
        %357 = sbr.rel (%p355) target = $region36
      $region35: #{tpu_custom_call.1} parent=11 // pred_region
        _
      $region36: #{tpu_custom_call.1} parent=11 // pred_fallthru
        _
      // Predicated region
      $region37: #{tpu_custom_call.1} parent=11 // pred_check
        %p358 = pneg %p276
      $region38: #{tpu_custom_call.1} parent=11 // pred_check_branch
        %360 = sbr.rel (%p358) target = $region40
      $region39: #{tpu_custom_call.1} parent=11 // pred_region
        _
      $region40: #{tpu_custom_call.1} parent=11 // pred_fallthru
        _
      // Predicated region
      $region41: #{tpu_custom_call.1} parent=11 // pred_check
        %p361 = pneg %p297
      $region42: #{tpu_custom_call.1} parent=11 // pred_check_branch
        %363 = sbr.rel (%p361) target = $region44
      $region43: #{tpu_custom_call.1} parent=11 // pred_region
        _
      $region44: #{tpu_custom_call.1} parent=11 // pred_fallthru
        _
    $region12: #{tpu_custom_call.1} parent=5 // pred_fallthru
      _
    %p364 = scmp.lt.s32.totalorder %s17, 4
    // Predicated region
    $region45: #{tpu_custom_call.1} parent=5 // pred_check
      %p365 = pneg %p364
    $region46: #{tpu_custom_call.1} parent=5 // pred_check_branch
      %367 = sbr.rel (%p365) target = $region48
    $region47: #{tpu_custom_call.1} parent=5 // pred_region
      // Predicated region
      $region49: #{tpu_custom_call.1} parent=47 // pred_check
        %p368 = pneg %p59
      $region50: #{tpu_custom_call.1} parent=47 // pred_check_branch
        %370 = sbr.rel (%p368) target = $region52
      $region51: #{tpu_custom_call.1} parent=47 // pred_region
        %s371 = smul.u32 %s25, 8
        %s372 = ssub.s32 %s371, 1
        %p373 = scmp.gt.s32.totalorder %s372, 0
        %s374 = scalar_select %p373, %s372, 0
        %s375 = smul.u32 2, %s374
        %p376 = scmp.lt.s32.totalorder %s24, 1
        %s377 = scalar_select %p376, %s24, 1
        %p378 = scmp.lt.s32.totalorder %s375, 31
        %s379 = scalar_select %p378, %s375, 31
        %s380 = smul.addr %s377, 32
        %s381 = sadd.s32 %s379, %s380
        %s382 = smul.addr %s381, 8
        %s383 = scalar_lea.vmem %s0, %s382
        %s384 = smul.u32 %s25, 8
        %s385 = ssub.s32 %s384, 1
        %p386 = scmp.gt.s32.totalorder %s385, 0
        %s387 = scalar_select %p386, %s385, 0
        %s388 = smul.u32 2, %s387
      $region52: #{tpu_custom_call.1} parent=47 // pred_fallthru
        _
      // Predicated region
      $region53: #{tpu_custom_call.1} parent=47 // pred_check
        %p389 = pneg %p87
      $region54: #{tpu_custom_call.1} parent=47 // pred_check_branch
        %391 = sbr.rel (%p389) target = $region56
      $region55: #{tpu_custom_call.1} parent=47 // pred_region
        %s392 = smul.u32 16, %s25
        %p393 = scmp.lt.s32.totalorder %s24, 1
        %s394 = scalar_select %p393, %s24, 1
        %p395 = scmp.lt.s32.totalorder %s392, 31
        %s396 = scalar_select %p395, %s392, 31
        %s397 = smul.addr %s394, 32
        %s398 = sadd.s32 %s396, %s397
        %s399 = smul.addr %s398, 8
        %s400 = scalar_lea.vmem %s1, %s399
        %s401 = smul.u32 16, %s25
      $region56: #{tpu_custom_call.1} parent=47 // pred_fallthru
        _
      // Predicated region
      $region57: #{tpu_custom_call.1} parent=47 // pred_check
        %p402 = pneg %p123
      $region58: #{tpu_custom_call.1} parent=47 // pred_check_branch
        %404 = sbr.rel (%p402) target = $region60
      $region59: #{tpu_custom_call.1} parent=47 // pred_region
        %s405 = sadd.s32 %s25, 1
        %s406 = smul.u32 %s405, 8
        %p407 = scmp.lt.s32.totalorder %s406, 15
        %s408 = scalar_select %p407, %s406, 15
        %s409 = smul.u32 2, %s408
        %p410 = scmp.lt.s32.totalorder %s24, 1
        %s411 = scalar_select %p410, %s24, 1
        %p412 = scmp.lt.s32.totalorder %s409, 31
        %s413 = scalar_select %p412, %s409, 31
        %s414 = smul.addr %s411, 32
        %s415 = sadd.s32 %s413, %s414
        %s416 = smul.addr %s415, 8
        %s417 = scalar_lea.vmem %s2, %s416
        %s418 = sadd.s32 %s25, 1
        %s419 = smul.u32 %s418, 8
        %p420 = scmp.lt.s32.totalorder %s419, 15
        %s421 = scalar_select %p420, %s419, 15
        %s422 = smul.u32 2, %s421
      $region60: #{tpu_custom_call.1} parent=47 // pred_fallthru
        _
    $region48: #{tpu_custom_call.1} parent=5 // pred_fallthru
      _
    %p423 = scmp.le.s32.totalorder 1, %s17
    %p424 = scmp.lt.s32.totalorder %s17, 5
    %p425 = pnand %p423, %p424
    %p426 = pneg %p425
    // Predicated region
    $region61: #{tpu_custom_call.1} parent=5 // pred_check
      _
    $region62: #{tpu_custom_call.1} parent=5 // pred_check_branch
      %428 = sbr.rel (%p425) target = $region64
    $region63: #{tpu_custom_call.1} parent=5 // pred_region
      %s429 = ssub.s32 %s17, 1
      %s430 = smul.u32 %s27, 8
      %s431 = ssub.s32 %s430, 1
      %p432 = scmp.gt.s32.totalorder %s431, 0
      %s433 = scalar_select %p432, %s431, 0
      %s434 = smul.u32 2, %s433
      %p435 = scmp.lt.s32.totalorder %s26, 1
      %s436 = scalar_select %p435, %s26, 1
      %p437 = scmp.lt.s32.totalorder %s434, 31
      %s438 = scalar_select %p437, %s434, 31
      %s439 = smul.addr %s436, 32
      %s440 = sadd.s32 %s438, %s439
      %s441 = smul.addr %s440, 8
      %s442 = scalar_lea.vmem %s0, %s441
      %p443 = pneg %p65
      %p444 = pneg %p62
      %s445 = smul.u32 16, %s27
      %p446 = scmp.lt.s32.totalorder %s26, 1
      %s447 = scalar_select %p446, %s26, 1
      %p448 = scmp.lt.s32.totalorder %s445, 31
      %s449 = scalar_select %p448, %s445, 31
      %s450 = smul.addr %s447, 32
      %s451 = sadd.s32 %s449, %s450
      %s452 = smul.addr %s451, 8
      %s453 = scalar_lea.vmem %s1, %s452
      %p454 = pneg %p93
      %p455 = pneg %p90
      %s456 = sadd.s32 %s27, 1
      %s457 = smul.u32 %s456, 8
      %p458 = scmp.lt.s32.totalorder %s457, 15
      %s459 = scalar_select %p458, %s457, 15
      %s460 = smul.u32 2, %s459
      %p461 = scmp.lt.s32.totalorder %s26, 1
      %s462 = scalar_select %p461, %s26, 1
      %p463 = scmp.lt.s32.totalorder %s460, 31
      %s464 = scalar_select %p463, %s460, 31
      %s465 = smul.addr %s462, 32
      %s466 = sadd.s32 %s464, %s465
      %s467 = smul.addr %s466, 8
      %s468 = scalar_lea.vmem %s2, %s467
      %p469 = pneg %p129
      %p470 = pneg %p126
      %p471 = pneg %p150
      %p472 = pneg %p147
      %p473 = pneg %p171
      %p474 = pneg %p168
      %p475 = pneg %p192
      %p476 = pneg %p189
      %p477 = pneg %p213
      %p478 = pneg %p210
      %p479 = pneg %p234
      %p480 = pneg %p231
      %p481 = pneg %p255
      %p482 = pneg %p252
      %p483 = pneg %p276
      %p484 = pneg %p273
      %p485 = pneg %p297
      %p486 = pneg %p294
      %p487 = pneg %p325
      %p488 = pneg %p322
      %s489 = smul.u32 16, %s27
      %p490 = scmp.lt.s32.totalorder %s26, 1
      %s491 = scalar_select %p490, %s26, 1
      %p492 = scmp.lt.s32.totalorder %s489, 31
      %s493 = scalar_select %p492, %s489, 31
      %s494 = smul.addr %s491, 32
      %s495 = sadd.s32 %s493, %s494
      %s496 = smul.addr %s495, 8
      %s497 = scalar_lea.vmem %s11, %s496
      %s498 = smul.u32 %s27, 8
      %s499 = ssub.s32 %s498, 1
      %p500 = scmp.gt.s32.totalorder %s499, 0
      %s501 = scalar_select %p500, %s499, 0
      %s502 = smul.u32 2, %s501
      %p503 = scmp.lt.s32.totalorder %s26, 1
      %s504 = scalar_select %p503, %s26, 1
      %p505 = scmp.lt.s32.totalorder %s502, 31
      %s506 = scalar_select %p505, %s502, 31
      %s507 = smul.addr %s504, 32
      %s508 = sadd.s32 %s506, %s507
      %s509 = smul.addr %s508, 8
      %s510 = scalar_lea.vmem %s0, %s509
      %s511 = smul.u32 %s27, 8
      %s512 = ssub.s32 %s511, 1
      %p513 = scmp.gt.s32.totalorder %s512, 0
      %s514 = scalar_select %p513, %s512, 0
      %s515 = smul.u32 2, %s514
      %s516 = smul.u32 16, %s27
      %p517 = scmp.lt.s32.totalorder %s26, 1
      %s518 = scalar_select %p517, %s26, 1
      %p519 = scmp.lt.s32.totalorder %s516, 31
      %s520 = scalar_select %p519, %s516, 31
      %s521 = smul.addr %s518, 32
      %s522 = sadd.s32 %s520, %s521
      %s523 = smul.addr %s522, 8
      %s524 = scalar_lea.vmem %s1, %s523
      %s525 = smul.u32 16, %s27
      %s526 = sadd.s32 %s27, 1
      %s527 = smul.u32 %s526, 8
      %p528 = scmp.lt.s32.totalorder %s527, 15
      %s529 = scalar_select %p528, %s527, 15
      %s530 = smul.u32 2, %s529
      %p531 = scmp.lt.s32.totalorder %s26, 1
      %s532 = scalar_select %p531, %s26, 1
      %p533 = scmp.lt.s32.totalorder %s530, 31
      %s534 = scalar_select %p533, %s530, 31
      %s535 = smul.addr %s532, 32
      %s536 = sadd.s32 %s534, %s535
      %s537 = smul.addr %s536, 8
      %s538 = scalar_lea.vmem %s2, %s537
      %s539 = sadd.s32 %s27, 1
      %s540 = smul.u32 %s539, 8
      %p541 = scmp.lt.s32.totalorder %s540, 15
      %s542 = scalar_select %p541, %s540, 15
      %s543 = smul.u32 2, %s542
      %s544 = smul.u32 16, %s27
      %p545 = scmp.lt.s32.totalorder %s26, 1
      %s546 = scalar_select %p545, %s26, 1
      %p547 = scmp.lt.s32.totalorder %s544, 31
      %s548 = scalar_select %p547, %s544, 31
      %s549 = smul.addr %s546, 32
      %s550 = sadd.s32 %s548, %s549
      %s551 = smul.addr %s550, 8
      %s552 = scalar_lea.vmem %s11, %s551
      %s553 = smul.u32 16, %s27
      %v554 = vld [vmem:[%s510] sm:$0xff]
      %v555 = vld [vmem:[%s510 + $0x8] sm:$0xff]
      %v556 = vld [vmem:[%s524] sm:$0xff]
      %v557 = vld [vmem:[%s524 + $0x8] sm:$0xff]
      %v558 = vld [vmem:[%s524 + $0x10] sm:$0xff]
      %v559 = vld [vmem:[%s524 + $0x18] sm:$0xff]
      %v560 = vld [vmem:[%s524 + $0x20] sm:$0xff]
      %v561 = vld [vmem:[%s524 + $0x28] sm:$0xff]
      %v562 = vld [vmem:[%s524 + $0x30] sm:$0xff]
      %v563 = vld [vmem:[%s524 + $0x38] sm:$0xff]
      %v564 = vld [vmem:[%s524 + $0x40] sm:$0xff]
      %v565 = vld [vmem:[%s524 + $0x48] sm:$0xff]
      %v566 = vld [vmem:[%s524 + $0x50] sm:$0xff]
      %v567 = vld [vmem:[%s524 + $0x58] sm:$0xff]
      %v568 = vld [vmem:[%s524 + $0x60] sm:$0xff]
      %v569 = vld [vmem:[%s524 + $0x68] sm:$0xff]
      %v570 = vld [vmem:[%s524 + $0x70] sm:$0xff]
      %v571 = vld [vmem:[%s524 + $0x78] sm:$0xff]
      %v572 = vld [vmem:[%s538] sm:$0xff]
      %v573 = vld [vmem:[%s538 + $0x8] sm:$0xff]
      %v574 = vld [vmem:[%s3] sm:$0xff]
      %v575 = vld [vmem:[%s3 + $0x8] sm:$0xff]
      %v576 = vld [vmem:[%s3 + $0x10] sm:$0xff]
      %v577 = vld [vmem:[%s3 + $0x18] sm:$0xff]
      %v578 = vld [vmem:[%s3 + $0x20] sm:$0xff]
      %v579 = vld [vmem:[%s3 + $0x28] sm:$0xff]
      %v580 = vld [vmem:[%s3 + $0x30] sm:$0xff]
      %v581 = vld [vmem:[%s3 + $0x38] sm:$0xff]
      %v582 = vld [vmem:[%s3 + $0x40] sm:$0xff]
      %v583 = vld [vmem:[%s3 + $0x48] sm:$0xff]
      %v584 = vld [vmem:[%s3 + $0x50] sm:$0xff]
      %v585 = vld [vmem:[%s3 + $0x58] sm:$0xff]
      %v586 = vld [vmem:[%s3 + $0x60] sm:$0xff]
      %v587 = vld [vmem:[%s3 + $0x68] sm:$0xff]
      %v588 = vld [vmem:[%s3 + $0x70] sm:$0xff]
      %v589 = vld [vmem:[%s3 + $0x78] sm:$0xff]
      %v590 = vld [vmem:[%s3 + $0x80] sm:$0xff]
      %v591 = vld [vmem:[%s3 + $0x88] sm:$0xff]
      %v592 = vld [vmem:[%s3 + $0x90] sm:$0xff]
      %v593 = vld [vmem:[%s3 + $0x98] sm:$0xff]
      %595 = vset.pattern.permute.xlu0 0
      %596 = vperm.xlu0 %595, %v574
      %v597 = vpop.permute.xlu0 %596
      %599 = vset.pattern.permute.xlu0 0
      %600 = vperm.xlu0 %599, %v575
      %v601 = vpop.permute.xlu0 %600
      %603 = vset.pattern.permute.xlu0 0
      %604 = vperm.xlu0 %603, %v576
      %v605 = vpop.permute.xlu0 %604
      %607 = vset.pattern.permute.xlu0 0
      %608 = vperm.xlu0 %607, %v577
      %v609 = vpop.permute.xlu0 %608
      %611 = vset.pattern.permute.xlu0 0
      %612 = vperm.xlu0 %611, %v578
      %v613 = vpop.permute.xlu0 %612
      %615 = vset.pattern.permute.xlu0 0
      %616 = vperm.xlu0 %615, %v579
      %v617 = vpop.permute.xlu0 %616
      %619 = vset.pattern.permute.xlu0 0
      %620 = vperm.xlu0 %619, %v580
      %v621 = vpop.permute.xlu0 %620
      %623 = vset.pattern.permute.xlu0 0
      %624 = vperm.xlu0 %623, %v581
      %v625 = vpop.permute.xlu0 %624
      %627 = vset.pattern.permute.xlu0 0
      %628 = vperm.xlu0 %627, %v582
      %v629 = vpop.permute.xlu0 %628
      %631 = vset.pattern.permute.xlu0 0
      %632 = vperm.xlu0 %631, %v583
      %v633 = vpop.permute.xlu0 %632
      %635 = vset.pattern.permute.xlu0 0
      %636 = vperm.xlu0 %635, %v584
      %v637 = vpop.permute.xlu0 %636
      %639 = vset.pattern.permute.xlu0 0
      %640 = vperm.xlu0 %639, %v585
      %v641 = vpop.permute.xlu0 %640
      %643 = vset.pattern.permute.xlu0 0
      %644 = vperm.xlu0 %643, %v586
      %v645 = vpop.permute.xlu0 %644
      %647 = vset.pattern.permute.xlu0 0
      %648 = vperm.xlu0 %647, %v587
      %v649 = vpop.permute.xlu0 %648
      %651 = vset.pattern.permute.xlu0 0
      %652 = vperm.xlu0 %651, %v588
      %v653 = vpop.permute.xlu0 %652
      %655 = vset.pattern.permute.xlu0 0
      %656 = vperm.xlu0 %655, %v589
      %v657 = vpop.permute.xlu0 %656
      %659 = vset.pattern.permute.xlu0 0
      %660 = vperm.xlu0 %659, %v590
      %v661 = vpop.permute.xlu0 %660
      %663 = vset.pattern.permute.xlu0 0
      %664 = vperm.xlu0 %663, %v591
      %v665 = vpop.permute.xlu0 %664
      %667 = vset.pattern.permute.xlu0 0
      %668 = vperm.xlu0 %667, %v592
      %v669 = vpop.permute.xlu0 %668
      %671 = vset.pattern.permute.xlu0 0
      %672 = vperm.xlu0 %671, %v593
      %v673 = vpop.permute.xlu0 %672
      %vm674 = vcmask 1046528
      %v675 = vrot.slane %v597, 1
      %v676 = vrot.slane %v601, 1
      %v677 = vsel %vm674, %v675, %v676
      %v678 = vrot.slane %v605, 1
      %v679 = vsel %vm674, %v676, %v678
      %v680 = vrot.slane %v609, 1
      %v681 = vsel %vm674, %v678, %v680
      %v682 = vrot.slane %v613, 1
      %v683 = vsel %vm674, %v680, %v682
      %v684 = vrot.slane %v617, 1
      %v685 = vsel %vm674, %v682, %v684
      %v686 = vrot.slane %v621, 1
      %v687 = vsel %vm674, %v684, %v686
      %v688 = vrot.slane %v625, 1
      %v689 = vsel %vm674, %v686, %v688
      %v690 = vrot.slane %v629, 1
      %v691 = vsel %vm674, %v688, %v690
      %v692 = vrot.slane %v633, 1
      %v693 = vsel %vm674, %v690, %v692
      %v694 = vrot.slane %v637, 1
      %v695 = vsel %vm674, %v692, %v694
      %v696 = vrot.slane %v641, 1
      %v697 = vsel %vm674, %v694, %v696
      %v698 = vrot.slane %v645, 1
      %v699 = vsel %vm674, %v696, %v698
      %v700 = vrot.slane %v649, 1
      %v701 = vsel %vm674, %v698, %v700
      %v702 = vrot.slane %v653, 1
      %v703 = vsel %vm674, %v700, %v702
      %v704 = vrot.slane %v657, 1
      %v705 = vsel %vm674, %v702, %v704
      %v706 = vrot.slane %v661, 1
      %v707 = vsel %vm674, %v704, %v706
      %v708 = vrot.slane %v665, 1
      %v709 = vsel %vm674, %v706, %v708
      %v710 = vrot.slane %v669, 1
      %v711 = vsel %vm674, %v708, %v710
      %v712 = vrot.slane %v673, 1
      %v713 = vsel %vm674, %v710, %v712
      %v735 = vmul.f32 %v675, 0.0
      %v736 = vmul.f32 %v554, %v677
      %v737 = vmul.f32 %v555, %v679
      %v738 = vmul.f32 %v556, %v681
      %v739 = vmul.f32 %v557, %v683
      %v740 = vmul.f32 %v558, %v685
      %v741 = vmul.f32 %v559, %v687
      %v742 = vmul.f32 %v560, %v689
      %v743 = vmul.f32 %v561, %v691
      %v744 = vmul.f32 %v562, %v693
      %v745 = vmul.f32 %v563, %v695
      %v746 = vmul.f32 %v564, %v697
      %v747 = vmul.f32 %v565, %v699
      %v748 = vmul.f32 %v566, %v701
      %v749 = vmul.f32 %v567, %v703
      %v750 = vmul.f32 %v568, %v705
      %v751 = vmul.f32 %v569, %v707
      %v752 = vmul.f32 %v570, %v709
      %v753 = vmul.f32 %v571, %v711
      %v754 = vmul.f32 %v572, %v713
      %v755 = vmul.f32 %v573, %v712
      %v756 = vld [vmem:[%s4] sm:$0xff]
      %v757 = vld [vmem:[%s4 + $0x8] sm:$0xff]
      %v758 = vld [vmem:[%s4 + $0x10] sm:$0xff]
      %v759 = vld [vmem:[%s4 + $0x18] sm:$0xff]
      %v760 = vld [vmem:[%s4 + $0x20] sm:$0xff]
      %v761 = vld [vmem:[%s4 + $0x28] sm:$0xff]
      %v762 = vld [vmem:[%s4 + $0x30] sm:$0xff]
      %v763 = vld [vmem:[%s4 + $0x38] sm:$0xff]
      %v764 = vld [vmem:[%s4 + $0x40] sm:$0xff]
      %v765 = vld [vmem:[%s4 + $0x48] sm:$0xff]
      %v766 = vld [vmem:[%s4 + $0x50] sm:$0xff]
      %v767 = vld [vmem:[%s4 + $0x58] sm:$0xff]
      %v768 = vld [vmem:[%s4 + $0x60] sm:$0xff]
      %v769 = vld [vmem:[%s4 + $0x68] sm:$0xff]
      %v770 = vld [vmem:[%s4 + $0x70] sm:$0xff]
      %v771 = vld [vmem:[%s4 + $0x78] sm:$0xff]
      %v772 = vld [vmem:[%s4 + $0x80] sm:$0xff]
      %v773 = vld [vmem:[%s4 + $0x88] sm:$0xff]
      %v774 = vld [vmem:[%s4 + $0x90] sm:$0xff]
      %v775 = vld [vmem:[%s4 + $0x98] sm:$0xff]
      %777 = vset.pattern.permute.xlu0 0
      %778 = vperm.xlu0 %777, %v756
      %v779 = vpop.permute.xlu0 %778
      %781 = vset.pattern.permute.xlu0 0
      %782 = vperm.xlu0 %781, %v757
      %v783 = vpop.permute.xlu0 %782
      %785 = vset.pattern.permute.xlu0 0
      %786 = vperm.xlu0 %785, %v758
      %v787 = vpop.permute.xlu0 %786
      %789 = vset.pattern.permute.xlu0 0
      %790 = vperm.xlu0 %789, %v759
      %v791 = vpop.permute.xlu0 %790
      %793 = vset.pattern.permute.xlu0 0
      %794 = vperm.xlu0 %793, %v760
      %v795 = vpop.permute.xlu0 %794
      %797 = vset.pattern.permute.xlu0 0
      %798 = vperm.xlu0 %797, %v761
      %v799 = vpop.permute.xlu0 %798
      %801 = vset.pattern.permute.xlu0 0
      %802 = vperm.xlu0 %801, %v762
      %v803 = vpop.permute.xlu0 %802
      %805 = vset.pattern.permute.xlu0 0
      %806 = vperm.xlu0 %805, %v763
      %v807 = vpop.permute.xlu0 %806
      %809 = vset.pattern.permute.xlu0 0
      %810 = vperm.xlu0 %809, %v764
      %v811 = vpop.permute.xlu0 %810
      %813 = vset.pattern.permute.xlu0 0
      %814 = vperm.xlu0 %813, %v765
      %v815 = vpop.permute.xlu0 %814
      %817 = vset.pattern.permute.xlu0 0
      %818 = vperm.xlu0 %817, %v766
      %v819 = vpop.permute.xlu0 %818
      %821 = vset.pattern.permute.xlu0 0
      %822 = vperm.xlu0 %821, %v767
      %v823 = vpop.permute.xlu0 %822
      %825 = vset.pattern.permute.xlu0 0
      %826 = vperm.xlu0 %825, %v768
      %v827 = vpop.permute.xlu0 %826
      %829 = vset.pattern.permute.xlu0 0
      %830 = vperm.xlu0 %829, %v769
      %v831 = vpop.permute.xlu0 %830
      %833 = vset.pattern.permute.xlu0 0
      %834 = vperm.xlu0 %833, %v770
      %v835 = vpop.permute.xlu0 %834
      %837 = vset.pattern.permute.xlu0 0
      %838 = vperm.xlu0 %837, %v771
      %v839 = vpop.permute.xlu0 %838
      %841 = vset.pattern.permute.xlu0 0
      %842 = vperm.xlu0 %841, %v772
      %v843 = vpop.permute.xlu0 %842
      %845 = vset.pattern.permute.xlu0 0
      %846 = vperm.xlu0 %845, %v773
      %v847 = vpop.permute.xlu0 %846
      %849 = vset.pattern.permute.xlu0 0
      %850 = vperm.xlu0 %849, %v774
      %v851 = vpop.permute.xlu0 %850
      %853 = vset.pattern.permute.xlu0 0
      %854 = vperm.xlu0 %853, %v775
      %v855 = vpop.permute.xlu0 %854
      %vm856 = vcmask 1040384
      %v857 = vrot.slane %v779, 7
      %v858 = vrot.slane %v783, 7
      %v859 = vsel %vm856, %v857, %v858
      %v860 = vrot.slane %v787, 7
      %v861 = vsel %vm856, %v858, %v860
      %v862 = vrot.slane %v791, 7
      %v863 = vsel %vm856, %v860, %v862
      %v864 = vrot.slane %v795, 7
      %v865 = vsel %vm856, %v862, %v864
      %v866 = vrot.slane %v799, 7
      %v867 = vsel %vm856, %v864, %v866
      %v868 = vrot.slane %v803, 7
      %v869 = vsel %vm856, %v866, %v868
      %v870 = vrot.slane %v807, 7
      %v871 = vsel %vm856, %v868, %v870
      %v872 = vrot.slane %v811, 7
      %v873 = vsel %vm856, %v870, %v872
      %v874 = vrot.slane %v815, 7
      %v875 = vsel %vm856, %v872, %v874
      %v876 = vrot.slane %v819, 7
      %v877 = vsel %vm856, %v874, %v876
      %v878 = vrot.slane %v823, 7
      %v879 = vsel %vm856, %v876, %v878
      %v880 = vrot.slane %v827, 7
      %v881 = vsel %vm856, %v878, %v880
      %v882 = vrot.slane %v831, 7
      %v883 = vsel %vm856, %v880, %v882
      %v884 = vrot.slane %v835, 7
      %v885 = vsel %vm856, %v882, %v884
      %v886 = vrot.slane %v839, 7
      %v887 = vsel %vm856, %v884, %v886
      %v888 = vrot.slane %v843, 7
      %v889 = vsel %vm856, %v886, %v888
      %v890 = vrot.slane %v847, 7
      %v891 = vsel %vm856, %v888, %v890
      %v892 = vrot.slane %v851, 7
      %v893 = vsel %vm856, %v890, %v892
      %v894 = vrot.slane %v855, 7
      %v895 = vsel %vm856, %v892, %v894
      %v917 = vmul.f32 %v554, %v857
      %v918 = vmul.f32 %v555, %v859
      %v919 = vmul.f32 %v556, %v861
      %v920 = vmul.f32 %v557, %v863
      %v921 = vmul.f32 %v558, %v865
      %v922 = vmul.f32 %v559, %v867
      %v923 = vmul.f32 %v560, %v869
      %v924 = vmul.f32 %v561, %v871
      %v925 = vmul.f32 %v562, %v873
      %v926 = vmul.f32 %v563, %v875
      %v927 = vmul.f32 %v564, %v877
      %v928 = vmul.f32 %v565, %v879
      %v929 = vmul.f32 %v566, %v881
      %v930 = vmul.f32 %v567, %v883
      %v931 = vmul.f32 %v568, %v885
      %v932 = vmul.f32 %v569, %v887
      %v933 = vmul.f32 %v570, %v889
      %v934 = vmul.f32 %v571, %v891
      %v935 = vmul.f32 %v572, %v893
      %v936 = vmul.f32 %v573, %v895
      %v937 = vmul.f32 %v894, 0.0
      %v938 = vld [vmem:[%s5] sm:$0xf]
      %s939 = scalar_lea.vmem %s5, 4
      %v940 = vld [vmem:[%s939] sm:$0xf]
      %vm941 = vcmask 31744
      %v943 = vsel %vm941, %v554, 0
      %v946 = vsel %vm941, %v555, 0
      %v949 = vsel %vm941, %v556, 0
      %v952 = vsel %vm941, %v557, 0
      %v955 = vsel %vm941, %v558, 0
      %v958 = vsel %vm941, %v559, 0
      %v961 = vsel %vm941, %v560, 0
      %v964 = vsel %vm941, %v561, 0
      %v967 = vsel %vm941, %v562, 0
      %v970 = vsel %vm941, %v563, 0
      %v973 = vsel %vm941, %v564, 0
      %v976 = vsel %vm941, %v565, 0
      %v979 = vsel %vm941, %v566, 0
      %v982 = vsel %vm941, %v567, 0
      %v985 = vsel %vm941, %v568, 0
      %v988 = vsel %vm941, %v569, 0
      %v991 = vsel %vm941, %v570, 0
      %v994 = vsel %vm941, %v571, 0
      %v997 = vsel %vm941, %v572, 0
      %v1000 = vsel %vm941, %v573, 0
      %vm1002 = vcmask 1043456
      %v1004 = vsel %vm1002, %v940, 0
      %1006 = vmatprep.subr.mxu0 0.0
      %1007 = vmatpush1.msra.mxu0 %v1004
      %1008 = vmatprep.subr.mxu0 0.0
      %1009 = vmatpush1.msra.mxu0 0.0
      %1010 = vmatprep.subr.mxu0 0.0
      %1011 = vmatpush1.msra.mxu0 0.0
      %1012 = vmatprep.subr.mxu0 0.0
      %1013 = vmatpush1.msra.mxu0 0.0
      %1014 = vmatprep.subr.mxu0 0.0
      %1015 = vmatpush1.msra.mxu0 0.0
      %1016 = vmatprep.subr.mxu0 0.0
      %1017 = vmatpush1.msra.mxu0 0.0
      %1018 = vmatprep.subr.mxu0 0.0
      %1019 = vmatpush1.msra.mxu0 0.0
      %1020 = vmatprep.subr.mxu0 0.0
      %1021 = vmatpush1.msra.mxu0 0.0
      %1022 = vmatprep.subr.mxu0 0.0
      %1023 = vmatpush1.msra.mxu0 0.0
      %1024 = vmatprep.subr.mxu0 0.0
      %1025 = vmatpush1.msra.mxu0 0.0
      %1026 = vmatprep.subr.mxu0 0.0
      %1027 = vmatpush1.msra.mxu0 0.0
      %1028 = vmatprep.subr.mxu0 0.0
      %1029 = vmatpush1.msra.mxu0 0.0
      %1030 = vmatprep.subr.mxu0 0.0
      %1031 = vmatpush1.msra.mxu0 0.0
      %1032 = vmatprep.subr.mxu0 0.0
      %1033 = vmatpush1.msra.mxu0 0.0
      %1034 = vmatprep.subr.mxu0 0.0
      %1035 = vmatpush1.msra.mxu0 0.0
      %1036 = vmatprep.subr.mxu0 0.0
      %1037 = vmatpush1.msra.mxu0 0.0
      %1038 = vmatprep.subr.mxu0 0.0
      %1039 = vmatpush1.msra.mxu0 0.0
      %1040 = vmatprep.subr.mxu0 0.0
      %1041 = vmatpush1.msra.mxu0 0.0
      %1042 = vmatprep.subr.mxu0 0.0
      %1043 = vmatpush1.msra.mxu0 0.0
      %1044 = vmatprep.subr.mxu0 0.0
      %1045 = vmatpush1.msra.mxu0 0.0
      %1046 = vmatprep.subr.mxu0 0.0
      %1047 = vmatpush1.msra.mxu0 0.0
      %1048 = vmatprep.subr.mxu0 0.0
      %1049 = vmatpush1.msra.mxu0 0.0
      %1050 = vmatprep.subr.mxu0 0.0
      %1051 = vmatpush1.msra.mxu0 0.0
      %1052 = vmatprep.subr.mxu0 0.0
      %1053 = vmatpush1.msra.mxu0 0.0
      %1054 = vmatprep.subr.mxu0 0.0
      %1055 = vmatpush1.msra.mxu0 0.0
      %1056 = vmatprep.subr.mxu0 0.0
      %1057 = vmatpush1.msra.mxu0 0.0
      %1058 = vmatprep.subr.mxu0 0.0
      %1059 = vmatpush1.msra.mxu0 0.0
      %1060 = vmatprep.subr.mxu0 0.0
      %1061 = vmatpush1.msra.mxu0 0.0
      %1062 = vmatprep.subr.mxu0 0.0
      %1063 = vmatpush1.msra.mxu0 0.0
      %1064 = vmatprep.subr.mxu0 0.0
      %1065 = vmatpush1.msra.mxu0 0.0
      %1066 = vmatprep.subr.mxu0 0.0
      %1067 = vmatpush1.msra.mxu0 0.0
      %1068 = vmatprep.subr.mxu0 0.0
      %1069 = vmatpush1.msra.mxu0 0.0
      %1070 = vmatprep.mubr.f32.mxu0 0.0
      %1071 = vmatmul.mubr.f32.gmra.mrb[0].mxu0 %v943
      %v1072 = vpop.f32.mrb[0].mxu0
      %v1073 = vadd.f32 0.0, %v1072
      %v1074 = vpop.f32.mrb[0].mxu0
      %1075 = vmatprep.mubr.f32.mxu0 0.0
      %1076 = vmatmul.mubr.f32.gmra.mrb[0].mxu0 %v946
      %v1077 = vpop.f32.mrb[0].mxu0
      %v1078 = vadd.f32 0.0, %v1077
      %v1079 = vpop.f32.mrb[0].mxu0
      %1080 = vmatprep.mubr.f32.mxu0 0.0
      %1081 = vmatmul.mubr.f32.gmra.mrb[0].mxu0 %v949
      %v1082 = vpop.f32.mrb[0].mxu0
      %v1083 = vadd.f32 0.0, %v1082
      %v1084 = vpop.f32.mrb[0].mxu0
      %1085 = vmatprep.mubr.f32.mxu0 0.0
      %1086 = vmatmul.mubr.f32.gmra.mrb[0].mxu0 %v952
      %v1087 = vpop.f32.mrb[0].mxu0
      %v1088 = vadd.f32 0.0, %v1087
      %v1089 = vpop.f32.mrb[0].mxu0
      %1090 = vmatprep.mubr.f32.mxu0 0.0
      %1091 = vmatmul.mubr.f32.gmra.mrb[0].mxu0 %v955
      %v1092 = vpop.f32.mrb[0].mxu0
      %v1093 = vadd.f32 0.0, %v1092
      %v1094 = vpop.f32.mrb[0].mxu0
      %1095 = vmatprep.mubr.f32.mxu0 0.0
      %1096 = vmatmul.mubr.f32.gmra.mrb[0].mxu0 %v958
      %v1097 = vpop.f32.mrb[0].mxu0
      %v1098 = vadd.f32 0.0, %v1097
      %v1099 = vpop.f32.mrb[0].mxu0
      %1100 = vmatprep.mubr.f32.mxu0 0.0
      %1101 = vmatmul.mubr.f32.gmra.mrb[0].mxu0 %v961
      %v1102 = vpop.f32.mrb[0].mxu0
      %v1103 = vadd.f32 0.0, %v1102
      %v1104 = vpop.f32.mrb[0].mxu0
      %1105 = vmatprep.mubr.f32.mxu0 0.0
      %1106 = vmatmul.mubr.f32.gmra.mrb[0].mxu0 %v964
      %v1107 = vpop.f32.mrb[0].mxu0
      %v1108 = vadd.f32 0.0, %v1107
      %v1109 = vpop.f32.mrb[0].mxu0
      %1110 = vmatprep.mubr.f32.mxu0 0.0
      %1111 = vmatmul.mubr.f32.gmra.mrb[0].mxu0 %v967
      %v1112 = vpop.f32.mrb[0].mxu0
      %v1113 = vadd.f32 0.0, %v1112
      %v1114 = vpop.f32.mrb[0].mxu0
      %1115 = vmatprep.mubr.f32.mxu0 0.0
      %1116 = vmatmul.mubr.f32.gmra.mrb[0].mxu0 %v970
      %v1117 = vpop.f32.mrb[0].mxu0
      %v1118 = vadd.f32 0.0, %v1117
      %v1119 = vpop.f32.mrb[0].mxu0
      %1120 = vmatprep.mubr.f32.mxu0 0.0
      %1121 = vmatmul.mubr.f32.gmra.mrb[0].mxu0 %v973
      %v1122 = vpop.f32.mrb[0].mxu0
      %v1123 = vadd.f32 0.0, %v1122
      %v1124 = vpop.f32.mrb[0].mxu0
      %1125 = vmatprep.mubr.f32.mxu0 0.0
      %1126 = vmatmul.mubr.f32.gmra.mrb[0].mxu0 %v976
      %v1127 = vpop.f32.mrb[0].mxu0
      %v1128 = vadd.f32 0.0, %v1127
      %v1129 = vpop.f32.mrb[0].mxu0
      %1130 = vmatprep.mubr.f32.mxu0 0.0
      %1131 = vmatmul.mubr.f32.gmra.mrb[0].mxu0 %v979
      %v1132 = vpop.f32.mrb[0].mxu0
      %v1133 = vadd.f32 0.0, %v1132
      %v1134 = vpop.f32.mrb[0].mxu0
      %1135 = vmatprep.mubr.f32.mxu0 0.0
      %1136 = vmatmul.mubr.f32.gmra.mrb[0].mxu0 %v982
      %v1137 = vpop.f32.mrb[0].mxu0
      %v1138 = vadd.f32 0.0, %v1137
      %v1139 = vpop.f32.mrb[0].mxu0
      %1140 = vmatprep.mubr.f32.mxu0 0.0
      %1141 = vmatmul.mubr.f32.gmra.mrb[0].mxu0 %v985
      %v1142 = vpop.f32.mrb[0].mxu0
      %v1143 = vadd.f32 0.0, %v1142
      %v1144 = vpop.f32.mrb[0].mxu0
      %1145 = vmatprep.mubr.f32.mxu0 0.0
      %1146 = vmatmul.mubr.f32.gmra.mrb[0].mxu0 %v988
      %v1147 = vpop.f32.mrb[0].mxu0
      %v1148 = vadd.f32 0.0, %v1147
      %v1149 = vpop.f32.mrb[0].mxu0
      %1150 = vmatprep.mubr.f32.mxu0 0.0
      %1151 = vmatmul.mubr.f32.gmra.mrb[0].mxu0 %v991
      %v1152 = vpop.f32.mrb[0].mxu0
      %v1153 = vadd.f32 0.0, %v1152
      %v1154 = vpop.f32.mrb[0].mxu0
      %1155 = vmatprep.mubr.f32.mxu0 0.0
      %1156 = vmatmul.mubr.f32.gmra.mrb[0].mxu0 %v994
      %v1157 = vpop.f32.mrb[0].mxu0
      %v1158 = vadd.f32 0.0, %v1157
      %v1159 = vpop.f32.mrb[0].mxu0
      %1160 = vmatprep.mubr.f32.mxu0 0.0
      %1161 = vmatmul.mubr.f32.gmra.mrb[0].mxu0 %v997
      %v1162 = vpop.f32.mrb[0].mxu0
      %v1163 = vadd.f32 0.0, %v1162
      %v1164 = vpop.f32.mrb[0].mxu0
      %1165 = vmatprep.mubr.f32.mxu0 0.0
      %1166 = vmatmul.mubr.f32.gmra.mrb[0].mxu0 %v1000
      %v1167 = vpop.f32.mrb[0].mxu0
      %v1168 = vadd.f32 0.0, %v1167
      %v1169 = vpop.f32.mrb[0].mxu0
      %1170 = vdwg.mxu0
      %v1192 = vrot.slane %v735, 7
      %v1193 = vrot.slane %v736, 7
      %v1194 = vsel %vm856, %v1192, %v1193
      %v1195 = vrot.slane %v737, 7
      %v1196 = vsel %vm856, %v1193, %v1195
      %v1197 = vrot.slane %v738, 7
      %v1198 = vsel %vm856, %v1195, %v1197
      %v1199 = vrot.slane %v739, 7
      %v1200 = vsel %vm856, %v1197, %v1199
      %v1201 = vrot.slane %v740, 7
      %v1202 = vsel %vm856, %v1199, %v1201
      %v1203 = vrot.slane %v741, 7
      %v1204 = vsel %vm856, %v1201, %v1203
      %v1205 = vrot.slane %v742, 7
      %v1206 = vsel %vm856, %v1203, %v1205
      %v1207 = vrot.slane %v743, 7
      %v1208 = vsel %vm856, %v1205, %v1207
      %v1209 = vrot.slane %v744, 7
      %v1210 = vsel %vm856, %v1207, %v1209
      %v1211 = vrot.slane %v745, 7
      %v1212 = vsel %vm856, %v1209, %v1211
      %v1213 = vrot.slane %v746, 7
      %v1214 = vsel %vm856, %v1211, %v1213
      %v1215 = vrot.slane %v747, 7
      %v1216 = vsel %vm856, %v1213, %v1215
      %v1217 = vrot.slane %v748, 7
      %v1218 = vsel %vm856, %v1215, %v1217
      %v1219 = vrot.slane %v749, 7
      %v1220 = vsel %vm856, %v1217, %v1219
      %v1221 = vrot.slane %v750, 7
      %v1222 = vsel %vm856, %v1219, %v1221
      %v1223 = vrot.slane %v751, 7
      %v1224 = vsel %vm856, %v1221, %v1223
      %v1225 = vrot.slane %v752, 7
      %v1226 = vsel %vm856, %v1223, %v1225
      %v1227 = vrot.slane %v753, 7
      %v1228 = vsel %vm856, %v1225, %v1227
      %v1229 = vrot.slane %v754, 7
      %v1230 = vsel %vm856, %v1227, %v1229
      %v1231 = vrot.slane %v755, 7
      %v1232 = vsel %vm856, %v1229, %v1231
      %v1233 = vsel %vm941, %v1194, 0
      %v1235 = vsel %vm941, %v1196, 0
      %v1237 = vsel %vm941, %v1198, 0
      %v1239 = vsel %vm941, %v1200, 0
      %v1241 = vsel %vm941, %v1202, 0
      %v1243 = vsel %vm941, %v1204, 0
      %v1245 = vsel %vm941, %v1206, 0
      %v1247 = vsel %vm941, %v1208, 0
      %v1249 = vsel %vm941, %v1210, 0
      %v1251 = vsel %vm941, %v1212, 0
      %v1253 = vsel %vm941, %v1214, 0
      %v1255 = vsel %vm941, %v1216, 0
      %v1257 = vsel %vm941, %v1218, 0
      %v1259 = vsel %vm941, %v1220, 0
      %v1261 = vsel %vm941, %v1222, 0
      %v1263 = vsel %vm941, %v1224, 0
      %v1265 = vsel %vm941, %v1226, 0
      %v1267 = vsel %vm941, %v1228, 0
      %v1269 = vsel %vm941, %v1230, 0
      %v1271 = vsel %vm941, %v1232, 0
      %v1274 = vsel %vm1002, %v938, 0
      %1276 = vmatprep.subr.mxu0 0.0
      %1277 = vmatpush1.msra.mxu0 %v1274
      %1278 = vmatprep.subr.mxu0 0.0
      %1279 = vmatpush1.msra.mxu0 0.0
      %1280 = vmatprep.subr.mxu0 0.0
      %1281 = vmatpush1.msra.mxu0 0.0
      %1282 = vmatprep.subr.mxu0 0.0
      %1283 = vmatpush1.msra.mxu0 0.0
      %1284 = vmatprep.subr.mxu0 0.0
      %1285 = vmatpush1.msra.mxu0 0.0
      %1286 = vmatprep.subr.mxu0 0.0
      %1287 = vmatpush1.msra.mxu0 0.0
      %1288 = vmatprep.subr.mxu0 0.0
      %1289 = vmatpush1.msra.mxu0 0.0
      %1290 = vmatprep.subr.mxu0 0.0
      %1291 = vmatpush1.msra.mxu0 0.0
      %1292 = vmatprep.subr.mxu0 0.0
      %1293 = vmatpush1.msra.mxu0 0.0
      %1294 = vmatprep.subr.mxu0 0.0
      %1295 = vmatpush1.msra.mxu0 0.0
      %1296 = vmatprep.subr.mxu0 0.0
      %1297 = vmatpush1.msra.mxu0 0.0
      %1298 = vmatprep.subr.mxu0 0.0
      %1299 = vmatpush1.msra.mxu0 0.0
      %1300 = vmatprep.subr.mxu0 0.0
      %1301 = vmatpush1.msra.mxu0 0.0
      %1302 = vmatprep.subr.mxu0 0.0
      %1303 = vmatpush1.msra.mxu0 0.0
      %1304 = vmatprep.subr.mxu0 0.0
      %1305 = vmatpush1.msra.mxu0 0.0
      %1306 = vmatprep.subr.mxu0 0.0
      %1307 = vmatpush1.msra.mxu0 0.0
      %1308 = vmatprep.subr.mxu0 0.0
      %1309 = vmatpush1.msra.mxu0 0.0
      %1310 = vmatprep.subr.mxu0 0.0
      %1311 = vmatpush1.msra.mxu0 0.0
      %1312 = vmatprep.subr.mxu0 0.0
      %1313 = vmatpush1.msra.mxu0 0.0
      %1314 = vmatprep.subr.mxu0 0.0
      %1315 = vmatpush1.msra.mxu0 0.0
      %1316 = vmatprep.subr.mxu0 0.0
      %1317 = vmatpush1.msra.mxu0 0.0
      %1318 = vmatprep.subr.mxu0 0.0
      %1319 = vmatpush1.msra.mxu0 0.0
      %1320 = vmatprep.subr.mxu0 0.0
      %1321 = vmatpush1.msra.mxu0 0.0
      %1322 = vmatprep.subr.mxu0 0.0
      %1323 = vmatpush1.msra.mxu0 0.0
      %1324 = vmatprep.subr.mxu0 0.0
      %1325 = vmatpush1.msra.mxu0 0.0
      %1326 = vmatprep.subr.mxu0 0.0
      %1327 = vmatpush1.msra.mxu0 0.0
      %1328 = vmatprep.subr.mxu0 0.0
      %1329 = vmatpush1.msra.mxu0 0.0
      %1330 = vmatprep.subr.mxu0 0.0
      %1331 = vmatpush1.msra.mxu0 0.0
      %1332 = vmatprep.subr.mxu0 0.0
      %1333 = vmatpush1.msra.mxu0 0.0
      %1334 = vmatprep.subr.mxu0 0.0
      %1335 = vmatpush1.msra.mxu0 0.0
      %1336 = vmatprep.subr.mxu0 0.0
      %1337 = vmatpush1.msra.mxu0 0.0
      %1338 = vmatprep.subr.mxu0 0.0
      %1339 = vmatpush1.msra.mxu0 0.0
      %1340 = vmatprep.mubr.f32.mxu0 0.0
      %1341 = vmatmul.mubr.f32.gmra.mrb[0].mxu0 %v1233
      %v1342 = vpop.f32.mrb[0].mxu0
      %v1343 = vadd.f32 %v1073, %v1342
      %v1344 = vpop.f32.mrb[0].mxu0
      %1345 = vmatprep.mubr.f32.mxu0 0.0
      %1346 = vmatmul.mubr.f32.gmra.mrb[0].mxu0 %v1235
      %v1347 = vpop.f32.mrb[0].mxu0
      %v1348 = vadd.f32 %v1078, %v1347
      %v1349 = vpop.f32.mrb[0].mxu0
      %1350 = vmatprep.mubr.f32.mxu0 0.0
      %1351 = vmatmul.mubr.f32.gmra.mrb[0].mxu0 %v1237
      %v1352 = vpop.f32.mrb[0].mxu0
      %v1353 = vadd.f32 %v1083, %v1352
      %v1354 = vpop.f32.mrb[0].mxu0
      %1355 = vmatprep.mubr.f32.mxu0 0.0
      %1356 = vmatmul.mubr.f32.gmra.mrb[0].mxu0 %v1239
      %v1357 = vpop.f32.mrb[0].mxu0
      %v1358 = vadd.f32 %v1088, %v1357
      %v1359 = vpop.f32.mrb[0].mxu0
      %1360 = vmatprep.mubr.f32.mxu0 0.0
      %1361 = vmatmul.mubr.f32.gmra.mrb[0].mxu0 %v1241
      %v1362 = vpop.f32.mrb[0].mxu0
      %v1363 = vadd.f32 %v1093, %v1362
      %v1364 = vpop.f32.mrb[0].mxu0
      %1365 = vmatprep.mubr.f32.mxu0 0.0
      %1366 = vmatmul.mubr.f32.gmra.mrb[0].mxu0 %v1243
      %v1367 = vpop.f32.mrb[0].mxu0
      %v1368 = vadd.f32 %v1098, %v1367
      %v1369 = vpop.f32.mrb[0].mxu0
      %1370 = vmatprep.mubr.f32.mxu0 0.0
      %1371 = vmatmul.mubr.f32.gmra.mrb[0].mxu0 %v1245
      %v1372 = vpop.f32.mrb[0].mxu0
      %v1373 = vadd.f32 %v1103, %v1372
      %v1374 = vpop.f32.mrb[0].mxu0
      %1375 = vmatprep.mubr.f32.mxu0 0.0
      %1376 = vmatmul.mubr.f32.gmra.mrb[0].mxu0 %v1247
      %v1377 = vpop.f32.mrb[0].mxu0
      %v1378 = vadd.f32 %v1108, %v1377
      %v1379 = vpop.f32.mrb[0].mxu0
      %1380 = vmatprep.mubr.f32.mxu0 0.0
      %1381 = vmatmul.mubr.f32.gmra.mrb[0].mxu0 %v1249
      %v1382 = vpop.f32.mrb[0].mxu0
      %v1383 = vadd.f32 %v1113, %v1382
      %v1384 = vpop.f32.mrb[0].mxu0
      %1385 = vmatprep.mubr.f32.mxu0 0.0
      %1386 = vmatmul.mubr.f32.gmra.mrb[0].mxu0 %v1251
      %v1387 = vpop.f32.mrb[0].mxu0
      %v1388 = vadd.f32 %v1118, %v1387
      %v1389 = vpop.f32.mrb[0].mxu0
      %1390 = vmatprep.mubr.f32.mxu0 0.0
      %1391 = vmatmul.mubr.f32.gmra.mrb[0].mxu0 %v1253
      %v1392 = vpop.f32.mrb[0].mxu0
      %v1393 = vadd.f32 %v1123, %v1392
      %v1394 = vpop.f32.mrb[0].mxu0
      %1395 = vmatprep.mubr.f32.mxu0 0.0
      %1396 = vmatmul.mubr.f32.gmra.mrb[0].mxu0 %v1255
      %v1397 = vpop.f32.mrb[0].mxu0
      %v1398 = vadd.f32 %v1128, %v1397
      %v1399 = vpop.f32.mrb[0].mxu0
      %1400 = vmatprep.mubr.f32.mxu0 0.0
      %1401 = vmatmul.mubr.f32.gmra.mrb[0].mxu0 %v1257
      %v1402 = vpop.f32.mrb[0].mxu0
      %v1403 = vadd.f32 %v1133, %v1402
      %v1404 = vpop.f32.mrb[0].mxu0
      %1405 = vmatprep.mubr.f32.mxu0 0.0
      %1406 = vmatmul.mubr.f32.gmra.mrb[0].mxu0 %v1259
      %v1407 = vpop.f32.mrb[0].mxu0
      %v1408 = vadd.f32 %v1138, %v1407
      %v1409 = vpop.f32.mrb[0].mxu0
      %1410 = vmatprep.mubr.f32.mxu0 0.0
      %1411 = vmatmul.mubr.f32.gmra.mrb[0].mxu0 %v1261
      %v1412 = vpop.f32.mrb[0].mxu0
      %v1413 = vadd.f32 %v1143, %v1412
      %v1414 = vpop.f32.mrb[0].mxu0
      %1415 = vmatprep.mubr.f32.mxu0 0.0
      %1416 = vmatmul.mubr.f32.gmra.mrb[0].mxu0 %v1263
      %v1417 = vpop.f32.mrb[0].mxu0
      %v1418 = vadd.f32 %v1148, %v1417
      %v1419 = vpop.f32.mrb[0].mxu0
      %1420 = vmatprep.mubr.f32.mxu0 0.0
      %1421 = vmatmul.mubr.f32.gmra.mrb[0].mxu0 %v1265
      %v1422 = vpop.f32.mrb[0].mxu0
      %v1423 = vadd.f32 %v1153, %v1422
      %v1424 = vpop.f32.mrb[0].mxu0
      %1425 = vmatprep.mubr.f32.mxu0 0.0
      %1426 = vmatmul.mubr.f32.gmra.mrb[0].mxu0 %v1267
      %v1427 = vpop.f32.mrb[0].mxu0
      %v1428 = vadd.f32 %v1158, %v1427
      %v1429 = vpop.f32.mrb[0].mxu0
      %1430 = vmatprep.mubr.f32.mxu0 0.0
      %1431 = vmatmul.mubr.f32.gmra.mrb[0].mxu0 %v1269
      %v1432 = vpop.f32.mrb[0].mxu0
      %v1433 = vadd.f32 %v1163, %v1432
      %v1434 = vpop.f32.mrb[0].mxu0
      %1435 = vmatprep.mubr.f32.mxu0 0.0
      %1436 = vmatmul.mubr.f32.gmra.mrb[0].mxu0 %v1271
      %v1437 = vpop.f32.mrb[0].mxu0
      %v1438 = vadd.f32 %v1168, %v1437
      %v1439 = vpop.f32.mrb[0].mxu0
      %1440 = vdwg.mxu0
      %s1441 = scalar_lea.vmem %s5, 8
      %v1442 = vld [vmem:[%s1441] sm:$0xf]
      %v1464 = vrot.slane %v917, 1
      %v1465 = vrot.slane %v918, 1
      %v1466 = vsel %vm674, %v1464, %v1465
      %v1467 = vrot.slane %v919, 1
      %v1468 = vsel %vm674, %v1465, %v1467
      %v1469 = vrot.slane %v920, 1
      %v1470 = vsel %vm674, %v1467, %v1469
      %v1471 = vrot.slane %v921, 1
      %v1472 = vsel %vm674, %v1469, %v1471
      %v1473 = vrot.slane %v922, 1
      %v1474 = vsel %vm674, %v1471, %v1473
      %v1475 = vrot.slane %v923, 1
      %v1476 = vsel %vm674, %v1473, %v1475
      %v1477 = vrot.slane %v924, 1
      %v1478 = vsel %vm674, %v1475, %v1477
      %v1479 = vrot.slane %v925, 1
      %v1480 = vsel %vm674, %v1477, %v1479
      %v1481 = vrot.slane %v926, 1
      %v1482 = vsel %vm674, %v1479, %v1481
      %v1483 = vrot.slane %v927, 1
      %v1484 = vsel %vm674, %v1481, %v1483
      %v1485 = vrot.slane %v928, 1
      %v1486 = vsel %vm674, %v1483, %v1485
      %v1487 = vrot.slane %v929, 1
      %v1488 = vsel %vm674, %v1485, %v1487
      %v1489 = vrot.slane %v930, 1
      %v1490 = vsel %vm674, %v1487, %v1489
      %v1491 = vrot.slane %v931, 1
      %v1492 = vsel %vm674, %v1489, %v1491
      %v1493 = vrot.slane %v932, 1
      %v1494 = vsel %vm674, %v1491, %v1493
      %v1495 = vrot.slane %v933, 1
      %v1496 = vsel %vm674, %v1493, %v1495
      %v1497 = vrot.slane %v934, 1
      %v1498 = vsel %vm674, %v1495, %v1497
      %v1499 = vrot.slane %v935, 1
      %v1500 = vsel %vm674, %v1497, %v1499
      %v1501 = vrot.slane %v936, 1
      %v1502 = vsel %vm674, %v1499, %v1501
      %v1503 = vrot.slane %v937, 1
      %v1504 = vsel %vm674, %v1501, %v1503
      %v1505 = vsel %vm941, %v1466, 0
      %v1507 = vsel %vm941, %v1468, 0
      %v1509 = vsel %vm941, %v1470, 0
      %v1511 = vsel %vm941, %v1472, 0
      %v1513 = vsel %vm941, %v1474, 0
      %v1515 = vsel %vm941, %v1476, 0
      %v1517 = vsel %vm941, %v1478, 0
      %v1519 = vsel %vm941, %v1480, 0
      %v1521 = vsel %vm941, %v1482, 0
      %v1523 = vsel %vm941, %v1484, 0
      %v1525 = vsel %vm941, %v1486, 0
      %v1527 = vsel %vm941, %v1488, 0
      %v1529 = vsel %vm941, %v1490, 0
      %v1531 = vsel %vm941, %v1492, 0
      %v1533 = vsel %vm941, %v1494, 0
      %v1535 = vsel %vm941, %v1496, 0
      %v1537 = vsel %vm941, %v1498, 0
      %v1539 = vsel %vm941, %v1500, 0
      %v1541 = vsel %vm941, %v1502, 0
      %v1543 = vsel %vm941, %v1504, 0
      %v1546 = vsel %vm1002, %v1442, 0
      %1548 = vmatprep.subr.mxu0 0.0
      %1549 = vmatpush1.msra.mxu0 %v1546
      %1550 = vmatprep.subr.mxu0 0.0
      %1551 = vmatpush1.msra.mxu0 0.0
      %1552 = vmatprep.subr.mxu0 0.0
      %1553 = vmatpush1.msra.mxu0 0.0
      %1554 = vmatprep.subr.mxu0 0.0
      %1555 = vmatpush1.msra.mxu0 0.0
      %1556 = vmatprep.subr.mxu0 0.0
      %1557 = vmatpush1.msra.mxu0 0.0
      %1558 = vmatprep.subr.mxu0 0.0
      %1559 = vmatpush1.msra.mxu0 0.0
      %1560 = vmatprep.subr.mxu0 0.0
      %1561 = vmatpush1.msra.mxu0 0.0
      %1562 = vmatprep.subr.mxu0 0.0
      %1563 = vmatpush1.msra.mxu0 0.0
      %1564 = vmatprep.subr.mxu0 0.0
      %1565 = vmatpush1.msra.mxu0 0.0
      %1566 = vmatprep.subr.mxu0 0.0
      %1567 = vmatpush1.msra.mxu0 0.0
      %1568 = vmatprep.subr.mxu0 0.0
      %1569 = vmatpush1.msra.mxu0 0.0
      %1570 = vmatprep.subr.mxu0 0.0
      %1571 = vmatpush1.msra.mxu0 0.0
      %1572 = vmatprep.subr.mxu0 0.0
      %1573 = vmatpush1.msra.mxu0 0.0
      %1574 = vmatprep.subr.mxu0 0.0
      %1575 = vmatpush1.msra.mxu0 0.0
      %1576 = vmatprep.subr.mxu0 0.0
      %1577 = vmatpush1.msra.mxu0 0.0
      %1578 = vmatprep.subr.mxu0 0.0
      %1579 = vmatpush1.msra.mxu0 0.0
      %1580 = vmatprep.subr.mxu0 0.0
      %1581 = vmatpush1.msra.mxu0 0.0
      %1582 = vmatprep.subr.mxu0 0.0
      %1583 = vmatpush1.msra.mxu0 0.0
      %1584 = vmatprep.subr.mxu0 0.0
      %1585 = vmatpush1.msra.mxu0 0.0
      %1586 = vmatprep.subr.mxu0 0.0
      %1587 = vmatpush1.msra.mxu0 0.0
      %1588 = vmatprep.subr.mxu0 0.0
      %1589 = vmatpush1.msra.mxu0 0.0
      %1590 = vmatprep.subr.mxu0 0.0
      %1591 = vmatpush1.msra.mxu0 0.0
      %1592 = vmatprep.subr.mxu0 0.0
      %1593 = vmatpush1.msra.mxu0 0.0
      %1594 = vmatprep.subr.mxu0 0.0
      %1595 = vmatpush1.msra.mxu0 0.0
      %1596 = vmatprep.subr.mxu0 0.0
      %1597 = vmatpush1.msra.mxu0 0.0
      %1598 = vmatprep.subr.mxu0 0.0
      %1599 = vmatpush1.msra.mxu0 0.0
      %1600 = vmatprep.subr.mxu0 0.0
      %1601 = vmatpush1.msra.mxu0 0.0
      %1602 = vmatprep.subr.mxu0 0.0
      %1603 = vmatpush1.msra.mxu0 0.0
      %1604 = vmatprep.subr.mxu0 0.0
      %1605 = vmatpush1.msra.mxu0 0.0
      %1606 = vmatprep.subr.mxu0 0.0
      %1607 = vmatpush1.msra.mxu0 0.0
      %1608 = vmatprep.subr.mxu0 0.0
      %1609 = vmatpush1.msra.mxu0 0.0
      %1610 = vmatprep.subr.mxu0 0.0
      %1611 = vmatpush1.msra.mxu0 0.0
      %1612 = vmatprep.mubr.f32.mxu0 0.0
      %1613 = vmatmul.mubr.f32.gmra.mrb[0].mxu0 %v1505
      %v1614 = vpop.f32.mrb[0].mxu0
      %v1615 = vadd.f32 0.0, %v1614
      %v1616 = vpop.f32.mrb[0].mxu0
      %1617 = vmatprep.mubr.f32.mxu0 0.0
      %1618 = vmatmul.mubr.f32.gmra.mrb[0].mxu0 %v1507
      %v1619 = vpop.f32.mrb[0].mxu0
      %v1620 = vadd.f32 0.0, %v1619
      %v1621 = vpop.f32.mrb[0].mxu0
      %1622 = vmatprep.mubr.f32.mxu0 0.0
      %1623 = vmatmul.mubr.f32.gmra.mrb[0].mxu0 %v1509
      %v1624 = vpop.f32.mrb[0].mxu0
      %v1625 = vadd.f32 0.0, %v1624
      %v1626 = vpop.f32.mrb[0].mxu0
      %1627 = vmatprep.mubr.f32.mxu0 0.0
      %1628 = vmatmul.mubr.f32.gmra.mrb[0].mxu0 %v1511
      %v1629 = vpop.f32.mrb[0].mxu0
      %v1630 = vadd.f32 0.0, %v1629
      %v1631 = vpop.f32.mrb[0].mxu0
      %1632 = vmatprep.mubr.f32.mxu0 0.0
      %1633 = vmatmul.mubr.f32.gmra.mrb[0].mxu0 %v1513
      %v1634 = vpop.f32.mrb[0].mxu0
      %v1635 = vadd.f32 0.0, %v1634
      %v1636 = vpop.f32.mrb[0].mxu0
      %1637 = vmatprep.mubr.f32.mxu0 0.0
      %1638 = vmatmul.mubr.f32.gmra.mrb[0].mxu0 %v1515
      %v1639 = vpop.f32.mrb[0].mxu0
      %v1640 = vadd.f32 0.0, %v1639
      %v1641 = vpop.f32.mrb[0].mxu0
      %1642 = vmatprep.mubr.f32.mxu0 0.0
      %1643 = vmatmul.mubr.f32.gmra.mrb[0].mxu0 %v1517
      %v1644 = vpop.f32.mrb[0].mxu0
      %v1645 = vadd.f32 0.0, %v1644
      %v1646 = vpop.f32.mrb[0].mxu0
      %1647 = vmatprep.mubr.f32.mxu0 0.0
      %1648 = vmatmul.mubr.f32.gmra.mrb[0].mxu0 %v1519
      %v1649 = vpop.f32.mrb[0].mxu0
      %v1650 = vadd.f32 0.0, %v1649
      %v1651 = vpop.f32.mrb[0].mxu0
      %1652 = vmatprep.mubr.f32.mxu0 0.0
      %1653 = vmatmul.mubr.f32.gmra.mrb[0].mxu0 %v1521
      %v1654 = vpop.f32.mrb[0].mxu0
      %v1655 = vadd.f32 0.0, %v1654
      %v1656 = vpop.f32.mrb[0].mxu0
      %1657 = vmatprep.mubr.f32.mxu0 0.0
      %1658 = vmatmul.mubr.f32.gmra.mrb[0].mxu0 %v1523
      %v1659 = vpop.f32.mrb[0].mxu0
      %v1660 = vadd.f32 0.0, %v1659
      %v1661 = vpop.f32.mrb[0].mxu0
      %1662 = vmatprep.mubr.f32.mxu0 0.0
      %1663 = vmatmul.mubr.f32.gmra.mrb[0].mxu0 %v1525
      %v1664 = vpop.f32.mrb[0].mxu0
      %v1665 = vadd.f32 0.0, %v1664
      %v1666 = vpop.f32.mrb[0].mxu0
      %1667 = vmatprep.mubr.f32.mxu0 0.0
      %1668 = vmatmul.mubr.f32.gmra.mrb[0].mxu0 %v1527
      %v1669 = vpop.f32.mrb[0].mxu0
      %v1670 = vadd.f32 0.0, %v1669
      %v1671 = vpop.f32.mrb[0].mxu0
      %1672 = vmatprep.mubr.f32.mxu0 0.0
      %1673 = vmatmul.mubr.f32.gmra.mrb[0].mxu0 %v1529
      %v1674 = vpop.f32.mrb[0].mxu0
      %v1675 = vadd.f32 0.0, %v1674
      %v1676 = vpop.f32.mrb[0].mxu0
      %1677 = vmatprep.mubr.f32.mxu0 0.0
      %1678 = vmatmul.mubr.f32.gmra.mrb[0].mxu0 %v1531
      %v1679 = vpop.f32.mrb[0].mxu0
      %v1680 = vadd.f32 0.0, %v1679
      %v1681 = vpop.f32.mrb[0].mxu0
      %1682 = vmatprep.mubr.f32.mxu0 0.0
      %1683 = vmatmul.mubr.f32.gmra.mrb[0].mxu0 %v1533
      %v1684 = vpop.f32.mrb[0].mxu0
      %v1685 = vadd.f32 0.0, %v1684
      %v1686 = vpop.f32.mrb[0].mxu0
      %1687 = vmatprep.mubr.f32.mxu0 0.0
      %1688 = vmatmul.mubr.f32.gmra.mrb[0].mxu0 %v1535
      %v1689 = vpop.f32.mrb[0].mxu0
      %v1690 = vadd.f32 0.0, %v1689
      %v1691 = vpop.f32.mrb[0].mxu0
      %1692 = vmatprep.mubr.f32.mxu0 0.0
      %1693 = vmatmul.mubr.f32.gmra.mrb[0].mxu0 %v1537
      %v1694 = vpop.f32.mrb[0].mxu0
      %v1695 = vadd.f32 0.0, %v1694
      %v1696 = vpop.f32.mrb[0].mxu0
      %1697 = vmatprep.mubr.f32.mxu0 0.0
      %1698 = vmatmul.mubr.f32.gmra.mrb[0].mxu0 %v1539
      %v1699 = vpop.f32.mrb[0].mxu0
      %v1700 = vadd.f32 0.0, %v1699
      %v1701 = vpop.f32.mrb[0].mxu0
      %1702 = vmatprep.mubr.f32.mxu0 0.0
      %1703 = vmatmul.mubr.f32.gmra.mrb[0].mxu0 %v1541
      %v1704 = vpop.f32.mrb[0].mxu0
      %v1705 = vadd.f32 0.0, %v1704
      %v1706 = vpop.f32.mrb[0].mxu0
      %1707 = vmatprep.mubr.f32.mxu0 0.0
      %1708 = vmatmul.mubr.f32.gmra.mrb[0].mxu0 %v1543
      %v1709 = vpop.f32.mrb[0].mxu0
      %v1710 = vadd.f32 0.0, %v1709
      %v1711 = vpop.f32.mrb[0].mxu0
      %1712 = vdwg.mxu0
      %v1713 = vadd.f32 %v1343, %v1615
      %v1714 = vadd.f32 %v1348, %v1620
      %v1715 = vadd.f32 %v1353, %v1625
      %v1716 = vadd.f32 %v1358, %v1630
      %v1717 = vadd.f32 %v1363, %v1635
      %v1718 = vadd.f32 %v1368, %v1640
      %v1719 = vadd.f32 %v1373, %v1645
      %v1720 = vadd.f32 %v1378, %v1650
      %v1721 = vadd.f32 %v1383, %v1655
      %v1722 = vadd.f32 %v1388, %v1660
      %v1723 = vadd.f32 %v1393, %v1665
      %v1724 = vadd.f32 %v1398, %v1670
      %v1725 = vadd.f32 %v1403, %v1675
      %v1726 = vadd.f32 %v1408, %v1680
      %v1727 = vadd.f32 %v1413, %v1685
      %v1728 = vadd.f32 %v1418, %v1690
      %v1729 = vadd.f32 %v1423, %v1695
      %v1730 = vadd.f32 %v1428, %v1700
      %v1731 = vadd.f32 %v1433, %v1705
      %v1732 = vadd.f32 %v1438, %v1710
      %v1733 = vld [vmem:[%s6] sm:$0x1]
      %v1735 = vlaneseq
      %v1736 = vshrl.u32 %v1735, 7
      %v1737 = vsub.s32 0, %v1736
      %v1738 = vrot.slane %v1733, %v1737
      %v1740 = vmul.f32 %v1713, %v1738
      %v1741 = vmul.f32 %v1714, %v1738
      %v1742 = vmul.f32 %v1715, %v1738
      %v1743 = vmul.f32 %v1716, %v1738
      %v1744 = vmul.f32 %v1717, %v1738
      %v1745 = vmul.f32 %v1718, %v1738
      %v1746 = vmul.f32 %v1719, %v1738
      %v1747 = vmul.f32 %v1720, %v1738
      %v1748 = vmul.f32 %v1721, %v1738
      %v1749 = vmul.f32 %v1722, %v1738
      %v1750 = vmul.f32 %v1723, %v1738
      %v1751 = vmul.f32 %v1724, %v1738
      %v1752 = vmul.f32 %v1725, %v1738
      %v1753 = vmul.f32 %v1726, %v1738
      %v1754 = vmul.f32 %v1727, %v1738
      %v1755 = vmul.f32 %v1728, %v1738
      %v1756 = vmul.f32 %v1729, %v1738
      %v1757 = vmul.f32 %v1730, %v1738
      %v1758 = vmul.f32 %v1731, %v1738
      %v1759 = vmul.f32 %v1732, %v1738
      %v1760 = vld [vmem:[%s7] sm:$0x1]
      %v1762 = vlaneseq
      %v1763 = vshrl.u32 %v1762, 7
      %v1764 = vsub.s32 0, %v1763
      %v1765 = vrot.slane %v1760, %v1764
      %v1767 = vadd.f32 %v1740, %v1765
      %v1768 = vadd.f32 %v1741, %v1765
      %v1769 = vadd.f32 %v1742, %v1765
      %v1770 = vadd.f32 %v1743, %v1765
      %v1771 = vadd.f32 %v1744, %v1765
      %v1772 = vadd.f32 %v1745, %v1765
      %v1773 = vadd.f32 %v1746, %v1765
      %v1774 = vadd.f32 %v1747, %v1765
      %v1775 = vadd.f32 %v1748, %v1765
      %v1776 = vadd.f32 %v1749, %v1765
      %v1777 = vadd.f32 %v1750, %v1765
      %v1778 = vadd.f32 %v1751, %v1765
      %v1779 = vadd.f32 %v1752, %v1765
      %v1780 = vadd.f32 %v1753, %v1765
      %v1781 = vadd.f32 %v1754, %v1765
      %v1782 = vadd.f32 %v1755, %v1765
      %v1783 = vadd.f32 %v1756, %v1765
      %v1784 = vadd.f32 %v1757, %v1765
      %v1785 = vadd.f32 %v1758, %v1765
      %v1786 = vadd.f32 %v1759, %v1765
      %v1787 = vxor.u32 %v1767, 2147483648
      %v1788 = vxor.u32 %v1768, 2147483648
      %v1789 = vxor.u32 %v1769, 2147483648
      %v1790 = vxor.u32 %v1770, 2147483648
      %v1791 = vxor.u32 %v1771, 2147483648
      %v1792 = vxor.u32 %v1772, 2147483648
      %v1793 = vxor.u32 %v1773, 2147483648
      %v1794 = vxor.u32 %v1774, 2147483648
      %v1795 = vxor.u32 %v1775, 2147483648
      %v1796 = vxor.u32 %v1776, 2147483648
      %v1797 = vxor.u32 %v1777, 2147483648
      %v1798 = vxor.u32 %v1778, 2147483648
      %v1799 = vxor.u32 %v1779, 2147483648
      %v1800 = vxor.u32 %v1780, 2147483648
      %v1801 = vxor.u32 %v1781, 2147483648
      %v1802 = vxor.u32 %v1782, 2147483648
      %v1803 = vxor.u32 %v1783, 2147483648
      %v1804 = vxor.u32 %v1784, 2147483648
      %v1805 = vxor.u32 %v1785, 2147483648
      %v1806 = vxor.u32 %v1786, 2147483648
      %v1807 = vmul.f32 %v1787, 1.442695
      %v1808 = vpow.pop %v1807
      %v1809 = vmul.f32 %v1788, 1.442695
      %v1810 = vpow.pop %v1809
      %v1811 = vmul.f32 %v1789, 1.442695
      %v1812 = vpow.pop %v1811
      %v1813 = vmul.f32 %v1790, 1.442695
      %v1814 = vpow.pop %v1813
      %v1815 = vmul.f32 %v1791, 1.442695
      %v1816 = vpow.pop %v1815
      %v1817 = vmul.f32 %v1792, 1.442695
      %v1818 = vpow.pop %v1817
      %v1819 = vmul.f32 %v1793, 1.442695
      %v1820 = vpow.pop %v1819
      %v1821 = vmul.f32 %v1794, 1.442695
      %v1822 = vpow.pop %v1821
      %v1823 = vmul.f32 %v1795, 1.442695
      %v1824 = vpow.pop %v1823
      %v1825 = vmul.f32 %v1796, 1.442695
      %v1826 = vpow.pop %v1825
      %v1827 = vmul.f32 %v1797, 1.442695
      %v1828 = vpow.pop %v1827
      %v1829 = vmul.f32 %v1798, 1.442695
      %v1830 = vpow.pop %v1829
      %v1831 = vmul.f32 %v1799, 1.442695
      %v1832 = vpow.pop %v1831
      %v1833 = vmul.f32 %v1800, 1.442695
      %v1834 = vpow.pop %v1833
      %v1835 = vmul.f32 %v1801, 1.442695
      %v1836 = vpow.pop %v1835
      %v1837 = vmul.f32 %v1802, 1.442695
      %v1838 = vpow.pop %v1837
      %v1839 = vmul.f32 %v1803, 1.442695
      %v1840 = vpow.pop %v1839
      %v1841 = vmul.f32 %v1804, 1.442695
      %v1842 = vpow.pop %v1841
      %v1843 = vmul.f32 %v1805, 1.442695
      %v1844 = vpow.pop %v1843
      %v1845 = vmul.f32 %v1806, 1.442695
      %v1846 = vpow.pop %v1845
      %v1847 = vadd.f32 %v1808, 1.0
      %v1848 = vadd.f32 %v1810, 1.0
      %v1849 = vadd.f32 %v1812, 1.0
      %v1850 = vadd.f32 %v1814, 1.0
      %v1851 = vadd.f32 %v1816, 1.0
      %v1852 = vadd.f32 %v1818, 1.0
      %v1853 = vadd.f32 %v1820, 1.0
      %v1854 = vadd.f32 %v1822, 1.0
      %v1855 = vadd.f32 %v1824, 1.0
      %v1856 = vadd.f32 %v1826, 1.0
      %v1857 = vadd.f32 %v1828, 1.0
      %v1858 = vadd.f32 %v1830, 1.0
      %v1859 = vadd.f32 %v1832, 1.0
      %v1860 = vadd.f32 %v1834, 1.0
      %v1861 = vadd.f32 %v1836, 1.0
      %v1862 = vadd.f32 %v1838, 1.0
      %v1863 = vadd.f32 %v1840, 1.0
      %v1864 = vadd.f32 %v1842, 1.0
      %v1865 = vadd.f32 %v1844, 1.0
      %v1866 = vadd.f32 %v1846, 1.0
      %v1867 = vrcp.pop %v1847
      %v1868 = vmul.f32 1.0, %v1867
      %v1869 = vrcp.pop %v1848
      %v1870 = vmul.f32 1.0, %v1869
      %v1871 = vrcp.pop %v1849
      %v1872 = vmul.f32 1.0, %v1871
      %v1873 = vrcp.pop %v1850
      %v1874 = vmul.f32 1.0, %v1873
      %v1875 = vrcp.pop %v1851
      %v1876 = vmul.f32 1.0, %v1875
      %v1877 = vrcp.pop %v1852
      %v1878 = vmul.f32 1.0, %v1877
      %v1879 = vrcp.pop %v1853
      %v1880 = vmul.f32 1.0, %v1879
      %v1881 = vrcp.pop %v1854
      %v1882 = vmul.f32 1.0, %v1881
      %v1883 = vrcp.pop %v1855
      %v1884 = vmul.f32 1.0, %v1883
      %v1885 = vrcp.pop %v1856
      %v1886 = vmul.f32 1.0, %v1885
      %v1887 = vrcp.pop %v1857
      %v1888 = vmul.f32 1.0, %v1887
      %v1889 = vrcp.pop %v1858
      %v1890 = vmul.f32 1.0, %v1889
      %v1891 = vrcp.pop %v1859
      %v1892 = vmul.f32 1.0, %v1891
      %v1893 = vrcp.pop %v1860
      %v1894 = vmul.f32 1.0, %v1893
      %v1895 = vrcp.pop %v1861
      %v1896 = vmul.f32 1.0, %v1895
      %v1897 = vrcp.pop %v1862
      %v1898 = vmul.f32 1.0, %v1897
      %v1899 = vrcp.pop %v1863
      %v1900 = vmul.f32 1.0, %v1899
      %v1901 = vrcp.pop %v1864
      %v1902 = vmul.f32 1.0, %v1901
      %v1903 = vrcp.pop %v1865
      %v1904 = vmul.f32 1.0, %v1903
      %v1905 = vrcp.pop %v1866
      %v1906 = vmul.f32 1.0, %v1905
      %v1907 = vmul.f32 %v1767, %v1868
      %v1908 = vmul.f32 %v1768, %v1870
      %v1909 = vmul.f32 %v1769, %v1872
      %v1910 = vmul.f32 %v1770, %v1874
      %v1911 = vmul.f32 %v1771, %v1876
      %v1912 = vmul.f32 %v1772, %v1878
      %v1913 = vmul.f32 %v1773, %v1880
      %v1914 = vmul.f32 %v1774, %v1882
      %v1915 = vmul.f32 %v1775, %v1884
      %v1916 = vmul.f32 %v1776, %v1886
      %v1917 = vmul.f32 %v1777, %v1888
      %v1918 = vmul.f32 %v1778, %v1890
      %v1919 = vmul.f32 %v1779, %v1892
      %v1920 = vmul.f32 %v1780, %v1894
      %v1921 = vmul.f32 %v1781, %v1896
      %v1922 = vmul.f32 %v1782, %v1898
      %v1923 = vmul.f32 %v1783, %v1900
      %v1924 = vmul.f32 %v1784, %v1902
      %v1925 = vmul.f32 %v1785, %v1904
      %v1926 = vmul.f32 %v1786, %v1906
      %p1927 = scmp.gt.s32.totalorder %s27, 0
      %s1928 = scalar_select %p1927, 1, 0
      %s1929 = scvt.s32.f32 %s1928
      %p1930 = scmp.lt.s32.totalorder %s27, 1
      %s1931 = scalar_select %p1930, 1, 0
      %s1932 = scvt.s32.f32 %s1931
      %v1933 = vstv %s1929
      %v1934 = vmul.f32 %v1907, %v1933
      %v1935 = vmul.f32 %v1908, %v1933
      %v1936 = vstv %s1932
      %v1937 = vmul.f32 %v1925, %v1936
      %v1938 = vmul.f32 %v1926, %v1936
      %v1939 = vld [vmem:[%s8] sm:$0xff]
      %s1940 = scalar_lea.vmem %s8, 8
      %v1941 = vld [vmem:[%s1940] sm:$0xff]
      %vm1942 = vcmask 64512
      %v1944 = vsel %vm1942, %v1909, 0
      %v1947 = vsel %vm1942, %v1910, 0
      %v1950 = vsel %vm1942, %v1911, 0
      %v1953 = vsel %vm1942, %v1912, 0
      %v1956 = vsel %vm1942, %v1913, 0
      %v1959 = vsel %vm1942, %v1914, 0
      %v1962 = vsel %vm1942, %v1915, 0
      %v1965 = vsel %vm1942, %v1916, 0
      %v1968 = vsel %vm1942, %v1917, 0
      %v1971 = vsel %vm1942, %v1918, 0
      %v1974 = vsel %vm1942, %v1919, 0
      %v1977 = vsel %vm1942, %v1920, 0
      %v1980 = vsel %vm1942, %v1921, 0
      %v1983 = vsel %vm1942, %v1922, 0
      %v1986 = vsel %vm1942, %v1923, 0
      %v1989 = vsel %vm1942, %v1924, 0
      %1991 = vmatprep.subr.mxu0 0.0
      %1992 = vmatpush1.msra.mxu0 %v1941
      %1993 = vmatprep.subr.mxu0 0.0
      %1994 = vmatpush1.msra.mxu0 0.0
      %1995 = vmatprep.subr.mxu0 0.0
      %1996 = vmatpush1.msra.mxu0 0.0
      %1997 = vmatprep.subr.mxu0 0.0
      %1998 = vmatpush1.msra.mxu0 0.0
      %1999 = vmatprep.subr.mxu0 0.0
      %2000 = vmatpush1.msra.mxu0 0.0
      %2001 = vmatprep.subr.mxu0 0.0
      %2002 = vmatpush1.msra.mxu0 0.0
      %2003 = vmatprep.subr.mxu0 0.0
      %2004 = vmatpush1.msra.mxu0 0.0
      %2005 = vmatprep.subr.mxu0 0.0
      %2006 = vmatpush1.msra.mxu0 0.0
      %2007 = vmatprep.subr.mxu0 0.0
      %2008 = vmatpush1.msra.mxu0 0.0
      %2009 = vmatprep.subr.mxu0 0.0
      %2010 = vmatpush1.msra.mxu0 0.0
      %2011 = vmatprep.subr.mxu0 0.0
      %2012 = vmatpush1.msra.mxu0 0.0
      %2013 = vmatprep.subr.mxu0 0.0
      %2014 = vmatpush1.msra.mxu0 0.0
      %2015 = vmatprep.subr.mxu0 0.0
      %2016 = vmatpush1.msra.mxu0 0.0
      %2017 = vmatprep.subr.mxu0 0.0
      %2018 = vmatpush1.msra.mxu0 0.0
      %2019 = vmatprep.subr.mxu0 0.0
      %2020 = vmatpush1.msra.mxu0 0.0
      %2021 = vmatprep.subr.mxu0 0.0
      %2022 = vmatpush1.msra.mxu0 0.0
      %2023 = vmatprep.subr.mxu0 0.0
      %2024 = vmatpush1.msra.mxu0 0.0
      %2025 = vmatprep.subr.mxu0 0.0
      %2026 = vmatpush1.msra.mxu0 0.0
      %2027 = vmatprep.subr.mxu0 0.0
      %2028 = vmatpush1.msra.mxu0 0.0
      %2029 = vmatprep.subr.mxu0 0.0
      %2030 = vmatpush1.msra.mxu0 0.0
      %2031 = vmatprep.subr.mxu0 0.0
      %2032 = vmatpush1.msra.mxu0 0.0
      %2033 = vmatprep.subr.mxu0 0.0
      %2034 = vmatpush1.msra.mxu0 0.0
      %2035 = vmatprep.subr.mxu0 0.0
      %2036 = vmatpush1.msra.mxu0 0.0
      %2037 = vmatprep.subr.mxu0 0.0
      %2038 = vmatpush1.msra.mxu0 0.0
      %2039 = vmatprep.subr.mxu0 0.0
      %2040 = vmatpush1.msra.mxu0 0.0
      %2041 = vmatprep.subr.mxu0 0.0
      %2042 = vmatpush1.msra.mxu0 0.0
      %2043 = vmatprep.subr.mxu0 0.0
      %2044 = vmatpush1.msra.mxu0 0.0
      %2045 = vmatprep.subr.mxu0 0.0
      %2046 = vmatpush1.msra.mxu0 0.0
      %2047 = vmatprep.subr.mxu0 0.0
      %2048 = vmatpush1.msra.mxu0 0.0
      %2049 = vmatprep.subr.mxu0 0.0
      %2050 = vmatpush1.msra.mxu0 0.0
      %2051 = vmatprep.subr.mxu0 0.0
      %2052 = vmatpush1.msra.mxu0 0.0
      %2053 = vmatprep.subr.mxu0 0.0
      %2054 = vmatpush1.msra.mxu0 0.0
      %2055 = vmatprep.mubr.f32.mxu0 0.0
      %2056 = vmatmul.mubr.f32.gmra.mrb[0].mxu0 %v1944
      %v2057 = vpop.f32.mrb[0].mxu0
      %v2058 = vadd.f32 0.0, %v2057
      %v2059 = vpop.f32.mrb[0].mxu0
      %2060 = vmatprep.mubr.f32.mxu0 0.0
      %2061 = vmatmul.mubr.f32.gmra.mrb[0].mxu0 %v1947
      %v2062 = vpop.f32.mrb[0].mxu0
      %v2063 = vadd.f32 0.0, %v2062
      %v2064 = vpop.f32.mrb[0].mxu0
      %2065 = vmatprep.mubr.f32.mxu0 0.0
      %2066 = vmatmul.mubr.f32.gmra.mrb[0].mxu0 %v1950
      %v2067 = vpop.f32.mrb[0].mxu0
      %v2068 = vadd.f32 0.0, %v2067
      %v2069 = vpop.f32.mrb[0].mxu0
      %2070 = vmatprep.mubr.f32.mxu0 0.0
      %2071 = vmatmul.mubr.f32.gmra.mrb[0].mxu0 %v1953
      %v2072 = vpop.f32.mrb[0].mxu0
      %v2073 = vadd.f32 0.0, %v2072
      %v2074 = vpop.f32.mrb[0].mxu0
      %2075 = vmatprep.mubr.f32.mxu0 0.0
      %2076 = vmatmul.mubr.f32.gmra.mrb[0].mxu0 %v1956
      %v2077 = vpop.f32.mrb[0].mxu0
      %v2078 = vadd.f32 0.0, %v2077
      %v2079 = vpop.f32.mrb[0].mxu0
      %2080 = vmatprep.mubr.f32.mxu0 0.0
      %2081 = vmatmul.mubr.f32.gmra.mrb[0].mxu0 %v1959
      %v2082 = vpop.f32.mrb[0].mxu0
      %v2083 = vadd.f32 0.0, %v2082
      %v2084 = vpop.f32.mrb[0].mxu0
      %2085 = vmatprep.mubr.f32.mxu0 0.0
      %2086 = vmatmul.mubr.f32.gmra.mrb[0].mxu0 %v1962
      %v2087 = vpop.f32.mrb[0].mxu0
      %v2088 = vadd.f32 0.0, %v2087
      %v2089 = vpop.f32.mrb[0].mxu0
      %2090 = vmatprep.mubr.f32.mxu0 0.0
      %2091 = vmatmul.mubr.f32.gmra.mrb[0].mxu0 %v1965
      %v2092 = vpop.f32.mrb[0].mxu0
      %v2093 = vadd.f32 0.0, %v2092
      %v2094 = vpop.f32.mrb[0].mxu0
      %2095 = vmatprep.mubr.f32.mxu0 0.0
      %2096 = vmatmul.mubr.f32.gmra.mrb[0].mxu0 %v1968
      %v2097 = vpop.f32.mrb[0].mxu0
      %v2098 = vadd.f32 0.0, %v2097
      %v2099 = vpop.f32.mrb[0].mxu0
      %2100 = vmatprep.mubr.f32.mxu0 0.0
      %2101 = vmatmul.mubr.f32.gmra.mrb[0].mxu0 %v1971
      %v2102 = vpop.f32.mrb[0].mxu0
      %v2103 = vadd.f32 0.0, %v2102
      %v2104 = vpop.f32.mrb[0].mxu0
      %2105 = vmatprep.mubr.f32.mxu0 0.0
      %2106 = vmatmul.mubr.f32.gmra.mrb[0].mxu0 %v1974
      %v2107 = vpop.f32.mrb[0].mxu0
      %v2108 = vadd.f32 0.0, %v2107
      %v2109 = vpop.f32.mrb[0].mxu0
      %2110 = vmatprep.mubr.f32.mxu0 0.0
      %2111 = vmatmul.mubr.f32.gmra.mrb[0].mxu0 %v1977
      %v2112 = vpop.f32.mrb[0].mxu0
      %v2113 = vadd.f32 0.0, %v2112
      %v2114 = vpop.f32.mrb[0].mxu0
      %2115 = vmatprep.mubr.f32.mxu0 0.0
      %2116 = vmatmul.mubr.f32.gmra.mrb[0].mxu0 %v1980
      %v2117 = vpop.f32.mrb[0].mxu0
      %v2118 = vadd.f32 0.0, %v2117
      %v2119 = vpop.f32.mrb[0].mxu0
      %2120 = vmatprep.mubr.f32.mxu0 0.0
      %2121 = vmatmul.mubr.f32.gmra.mrb[0].mxu0 %v1983
      %v2122 = vpop.f32.mrb[0].mxu0
      %v2123 = vadd.f32 0.0, %v2122
      %v2124 = vpop.f32.mrb[0].mxu0
      %2125 = vmatprep.mubr.f32.mxu0 0.0
      %2126 = vmatmul.mubr.f32.gmra.mrb[0].mxu0 %v1986
      %v2127 = vpop.f32.mrb[0].mxu0
      %v2128 = vadd.f32 0.0, %v2127
      %v2129 = vpop.f32.mrb[0].mxu0
      %2130 = vmatprep.mubr.f32.mxu0 0.0
      %2131 = vmatmul.mubr.f32.gmra.mrb[0].mxu0 %v1989
      %v2132 = vpop.f32.mrb[0].mxu0
      %v2133 = vadd.f32 0.0, %v2132
      %v2134 = vpop.f32.mrb[0].mxu0
      %2135 = vdwg.mxu0
      %v2137 = vsel %vm1942, %v1934, 0
      %v2140 = vsel %vm1942, %v1935, 0
      %2142 = vmatprep.subr.mxu0 0.0
      %2143 = vmatpush1.msra.mxu0 %v1939
      %2144 = vmatprep.subr.mxu0 0.0
      %2145 = vmatpush1.msra.mxu0 0.0
      %2146 = vmatprep.subr.mxu0 0.0
      %2147 = vmatpush1.msra.mxu0 0.0
      %2148 = vmatprep.subr.mxu0 0.0
      %2149 = vmatpush1.msra.mxu0 0.0
      %2150 = vmatprep.subr.mxu0 0.0
      %2151 = vmatpush1.msra.mxu0 0.0
      %2152 = vmatprep.subr.mxu0 0.0
      %2153 = vmatpush1.msra.mxu0 0.0
      %2154 = vmatprep.subr.mxu0 0.0
      %2155 = vmatpush1.msra.mxu0 0.0
      %2156 = vmatprep.subr.mxu0 0.0
      %2157 = vmatpush1.msra.mxu0 0.0
      %2158 = vmatprep.subr.mxu0 0.0
      %2159 = vmatpush1.msra.mxu0 0.0
      %2160 = vmatprep.subr.mxu0 0.0
      %2161 = vmatpush1.msra.mxu0 0.0
      %2162 = vmatprep.subr.mxu0 0.0
      %2163 = vmatpush1.msra.mxu0 0.0
      %2164 = vmatprep.subr.mxu0 0.0
      %2165 = vmatpush1.msra.mxu0 0.0
      %2166 = vmatprep.subr.mxu0 0.0
      %2167 = vmatpush1.msra.mxu0 0.0
      %2168 = vmatprep.subr.mxu0 0.0
      %2169 = vmatpush1.msra.mxu0 0.0
      %2170 = vmatprep.subr.mxu0 0.0
      %2171 = vmatpush1.msra.mxu0 0.0
      %2172 = vmatprep.subr.mxu0 0.0
      %2173 = vmatpush1.msra.mxu0 0.0
      %2174 = vmatprep.subr.mxu0 0.0
      %2175 = vmatpush1.msra.mxu0 0.0
      %2176 = vmatprep.subr.mxu0 0.0
      %2177 = vmatpush1.msra.mxu0 0.0
      %2178 = vmatprep.subr.mxu0 0.0
      %2179 = vmatpush1.msra.mxu0 0.0
      %2180 = vmatprep.subr.mxu0 0.0
      %2181 = vmatpush1.msra.mxu0 0.0
      %2182 = vmatprep.subr.mxu0 0.0
      %2183 = vmatpush1.msra.mxu0 0.0
      %2184 = vmatprep.subr.mxu0 0.0
      %2185 = vmatpush1.msra.mxu0 0.0
      %2186 = vmatprep.subr.mxu0 0.0
      %2187 = vmatpush1.msra.mxu0 0.0
      %2188 = vmatprep.subr.mxu0 0.0
      %2189 = vmatpush1.msra.mxu0 0.0
      %2190 = vmatprep.subr.mxu0 0.0
      %2191 = vmatpush1.msra.mxu0 0.0
      %2192 = vmatprep.subr.mxu0 0.0
      %2193 = vmatpush1.msra.mxu0 0.0
      %2194 = vmatprep.subr.mxu0 0.0
      %2195 = vmatpush1.msra.mxu0 0.0
      %2196 = vmatprep.subr.mxu0 0.0
      %2197 = vmatpush1.msra.mxu0 0.0
      %2198 = vmatprep.subr.mxu0 0.0
      %2199 = vmatpush1.msra.mxu0 0.0
      %2200 = vmatprep.subr.mxu0 0.0
      %2201 = vmatpush1.msra.mxu0 0.0
      %2202 = vmatprep.subr.mxu0 0.0
      %2203 = vmatpush1.msra.mxu0 0.0
      %2204 = vmatprep.subr.mxu0 0.0
      %2205 = vmatpush1.msra.mxu0 0.0
      %2206 = vmatprep.mubr.f32.mxu0 0.0
      %2207 = vmatmul.mubr.f32.gmra.mrb[0].mxu0 %v2137
      %v2208 = vpop.f32.mrb[0].mxu0
      %v2209 = vadd.f32 %v2058, %v2208
      %v2210 = vpop.f32.mrb[0].mxu0
      %2211 = vmatprep.mubr.f32.mxu0 0.0
      %2212 = vmatmul.mubr.f32.gmra.mrb[0].mxu0 %v2140
      %v2213 = vpop.f32.mrb[0].mxu0
      %v2214 = vadd.f32 %v2063, %v2213
      %v2215 = vpop.f32.mrb[0].mxu0
      %2216 = vmatprep.mubr.f32.mxu0 0.0
      %2217 = vmatmul.mubr.f32.gmra.mrb[0].mxu0 %v1944
      %v2218 = vpop.f32.mrb[0].mxu0
      %v2219 = vadd.f32 %v2068, %v2218
      %v2220 = vpop.f32.mrb[0].mxu0
      %2221 = vmatprep.mubr.f32.mxu0 0.0
      %2222 = vmatmul.mubr.f32.gmra.mrb[0].mxu0 %v1947
      %v2223 = vpop.f32.mrb[0].mxu0
      %v2224 = vadd.f32 %v2073, %v2223
      %v2225 = vpop.f32.mrb[0].mxu0
      %2226 = vmatprep.mubr.f32.mxu0 0.0
      %2227 = vmatmul.mubr.f32.gmra.mrb[0].mxu0 %v1950
      %v2228 = vpop.f32.mrb[0].mxu0
      %v2229 = vadd.f32 %v2078, %v2228
      %v2230 = vpop.f32.mrb[0].mxu0
      %2231 = vmatprep.mubr.f32.mxu0 0.0
      %2232 = vmatmul.mubr.f32.gmra.mrb[0].mxu0 %v1953
      %v2233 = vpop.f32.mrb[0].mxu0
      %v2234 = vadd.f32 %v2083, %v2233
      %v2235 = vpop.f32.mrb[0].mxu0
      %2236 = vmatprep.mubr.f32.mxu0 0.0
      %2237 = vmatmul.mubr.f32.gmra.mrb[0].mxu0 %v1956
      %v2238 = vpop.f32.mrb[0].mxu0
      %v2239 = vadd.f32 %v2088, %v2238
      %v2240 = vpop.f32.mrb[0].mxu0
      %2241 = vmatprep.mubr.f32.mxu0 0.0
      %2242 = vmatmul.mubr.f32.gmra.mrb[0].mxu0 %v1959
      %v2243 = vpop.f32.mrb[0].mxu0
      %v2244 = vadd.f32 %v2093, %v2243
      %v2245 = vpop.f32.mrb[0].mxu0
      %2246 = vmatprep.mubr.f32.mxu0 0.0
      %2247 = vmatmul.mubr.f32.gmra.mrb[0].mxu0 %v1962
      %v2248 = vpop.f32.mrb[0].mxu0
      %v2249 = vadd.f32 %v2098, %v2248
      %v2250 = vpop.f32.mrb[0].mxu0
      %2251 = vmatprep.mubr.f32.mxu0 0.0
      %2252 = vmatmul.mubr.f32.gmra.mrb[0].mxu0 %v1965
      %v2253 = vpop.f32.mrb[0].mxu0
      %v2254 = vadd.f32 %v2103, %v2253
      %v2255 = vpop.f32.mrb[0].mxu0
      %2256 = vmatprep.mubr.f32.mxu0 0.0
      %2257 = vmatmul.mubr.f32.gmra.mrb[0].mxu0 %v1968
      %v2258 = vpop.f32.mrb[0].mxu0
      %v2259 = vadd.f32 %v2108, %v2258
      %v2260 = vpop.f32.mrb[0].mxu0
      %2261 = vmatprep.mubr.f32.mxu0 0.0
      %2262 = vmatmul.mubr.f32.gmra.mrb[0].mxu0 %v1971
      %v2263 = vpop.f32.mrb[0].mxu0
      %v2264 = vadd.f32 %v2113, %v2263
      %v2265 = vpop.f32.mrb[0].mxu0
      %2266 = vmatprep.mubr.f32.mxu0 0.0
      %2267 = vmatmul.mubr.f32.gmra.mrb[0].mxu0 %v1974
      %v2268 = vpop.f32.mrb[0].mxu0
      %v2269 = vadd.f32 %v2118, %v2268
      %v2270 = vpop.f32.mrb[0].mxu0
      %2271 = vmatprep.mubr.f32.mxu0 0.0
      %2272 = vmatmul.mubr.f32.gmra.mrb[0].mxu0 %v1977
      %v2273 = vpop.f32.mrb[0].mxu0
      %v2274 = vadd.f32 %v2123, %v2273
      %v2275 = vpop.f32.mrb[0].mxu0
      %2276 = vmatprep.mubr.f32.mxu0 0.0
      %2277 = vmatmul.mubr.f32.gmra.mrb[0].mxu0 %v1980
      %v2278 = vpop.f32.mrb[0].mxu0
      %v2279 = vadd.f32 %v2128, %v2278
      %v2280 = vpop.f32.mrb[0].mxu0
      %2281 = vmatprep.mubr.f32.mxu0 0.0
      %2282 = vmatmul.mubr.f32.gmra.mrb[0].mxu0 %v1983
      %v2283 = vpop.f32.mrb[0].mxu0
      %v2284 = vadd.f32 %v2133, %v2283
      %v2285 = vpop.f32.mrb[0].mxu0
      %2286 = vdwg.mxu0
      %s2287 = scalar_lea.vmem %s8, 16
      %v2288 = vld [vmem:[%s2287] sm:$0xff]
      %v2290 = vsel %vm1942, %v1937, 0
      %v2293 = vsel %vm1942, %v1938, 0
      %2295 = vmatprep.subr.mxu0 0.0
      %2296 = vmatpush1.msra.mxu0 %v2288
      %2297 = vmatprep.subr.mxu0 0.0
      %2298 = vmatpush1.msra.mxu0 0.0
      %2299 = vmatprep.subr.mxu0 0.0
      %2300 = vmatpush1.msra.mxu0 0.0
      %2301 = vmatprep.subr.mxu0 0.0
      %2302 = vmatpush1.msra.mxu0 0.0
      %2303 = vmatprep.subr.mxu0 0.0
      %2304 = vmatpush1.msra.mxu0 0.0
      %2305 = vmatprep.subr.mxu0 0.0
      %2306 = vmatpush1.msra.mxu0 0.0
      %2307 = vmatprep.subr.mxu0 0.0
      %2308 = vmatpush1.msra.mxu0 0.0
      %2309 = vmatprep.subr.mxu0 0.0
      %2310 = vmatpush1.msra.mxu0 0.0
      %2311 = vmatprep.subr.mxu0 0.0
      %2312 = vmatpush1.msra.mxu0 0.0
      %2313 = vmatprep.subr.mxu0 0.0
      %2314 = vmatpush1.msra.mxu0 0.0
      %2315 = vmatprep.subr.mxu0 0.0
      %2316 = vmatpush1.msra.mxu0 0.0
      %2317 = vmatprep.subr.mxu0 0.0
      %2318 = vmatpush1.msra.mxu0 0.0
      %2319 = vmatprep.subr.mxu0 0.0
      %2320 = vmatpush1.msra.mxu0 0.0
      %2321 = vmatprep.subr.mxu0 0.0
      %2322 = vmatpush1.msra.mxu0 0.0
      %2323 = vmatprep.subr.mxu0 0.0
      %2324 = vmatpush1.msra.mxu0 0.0
      %2325 = vmatprep.subr.mxu0 0.0
      %2326 = vmatpush1.msra.mxu0 0.0
      %2327 = vmatprep.subr.mxu0 0.0
      %2328 = vmatpush1.msra.mxu0 0.0
      %2329 = vmatprep.subr.mxu0 0.0
      %2330 = vmatpush1.msra.mxu0 0.0
      %2331 = vmatprep.subr.mxu0 0.0
      %2332 = vmatpush1.msra.mxu0 0.0
      %2333 = vmatprep.subr.mxu0 0.0
      %2334 = vmatpush1.msra.mxu0 0.0
      %2335 = vmatprep.subr.mxu0 0.0
      %2336 = vmatpush1.msra.mxu0 0.0
      %2337 = vmatprep.subr.mxu0 0.0
      %2338 = vmatpush1.msra.mxu0 0.0
      %2339 = vmatprep.subr.mxu0 0.0
      %2340 = vmatpush1.msra.mxu0 0.0
      %2341 = vmatprep.subr.mxu0 0.0
      %2342 = vmatpush1.msra.mxu0 0.0
      %2343 = vmatprep.subr.mxu0 0.0
      %2344 = vmatpush1.msra.mxu0 0.0
      %2345 = vmatprep.subr.mxu0 0.0
      %2346 = vmatpush1.msra.mxu0 0.0
      %2347 = vmatprep.subr.mxu0 0.0
      %2348 = vmatpush1.msra.mxu0 0.0
      %2349 = vmatprep.subr.mxu0 0.0
      %2350 = vmatpush1.msra.mxu0 0.0
      %2351 = vmatprep.subr.mxu0 0.0
      %2352 = vmatpush1.msra.mxu0 0.0
      %2353 = vmatprep.subr.mxu0 0.0
      %2354 = vmatpush1.msra.mxu0 0.0
      %2355 = vmatprep.subr.mxu0 0.0
      %2356 = vmatpush1.msra.mxu0 0.0
      %2357 = vmatprep.subr.mxu0 0.0
      %2358 = vmatpush1.msra.mxu0 0.0
      %2359 = vmatprep.mubr.f32.mxu0 0.0
      %2360 = vmatmul.mubr.f32.gmra.mrb[0].mxu0 %v1950
      %v2361 = vpop.f32.mrb[0].mxu0
      %v2362 = vadd.f32 0.0, %v2361
      %v2363 = vpop.f32.mrb[0].mxu0
      %2364 = vmatprep.mubr.f32.mxu0 0.0
      %2365 = vmatmul.mubr.f32.gmra.mrb[0].mxu0 %v1953
      %v2366 = vpop.f32.mrb[0].mxu0
      %v2367 = vadd.f32 0.0, %v2366
      %v2368 = vpop.f32.mrb[0].mxu0
      %2369 = vmatprep.mubr.f32.mxu0 0.0
      %2370 = vmatmul.mubr.f32.gmra.mrb[0].mxu0 %v1956
      %v2371 = vpop.f32.mrb[0].mxu0
      %v2372 = vadd.f32 0.0, %v2371
      %v2373 = vpop.f32.mrb[0].mxu0
      %2374 = vmatprep.mubr.f32.mxu0 0.0
      %2375 = vmatmul.mubr.f32.gmra.mrb[0].mxu0 %v1959
      %v2376 = vpop.f32.mrb[0].mxu0
      %v2377 = vadd.f32 0.0, %v2376
      %v2378 = vpop.f32.mrb[0].mxu0
      %2379 = vmatprep.mubr.f32.mxu0 0.0
      %2380 = vmatmul.mubr.f32.gmra.mrb[0].mxu0 %v1962
      %v2381 = vpop.f32.mrb[0].mxu0
      %v2382 = vadd.f32 0.0, %v2381
      %v2383 = vpop.f32.mrb[0].mxu0
      %2384 = vmatprep.mubr.f32.mxu0 0.0
      %2385 = vmatmul.mubr.f32.gmra.mrb[0].mxu0 %v1965
      %v2386 = vpop.f32.mrb[0].mxu0
      %v2387 = vadd.f32 0.0, %v2386
      %v2388 = vpop.f32.mrb[0].mxu0
      %2389 = vmatprep.mubr.f32.mxu0 0.0
      %2390 = vmatmul.mubr.f32.gmra.mrb[0].mxu0 %v1968
      %v2391 = vpop.f32.mrb[0].mxu0
      %v2392 = vadd.f32 0.0, %v2391
      %v2393 = vpop.f32.mrb[0].mxu0
      %2394 = vmatprep.mubr.f32.mxu0 0.0
      %2395 = vmatmul.mubr.f32.gmra.mrb[0].mxu0 %v1971
      %v2396 = vpop.f32.mrb[0].mxu0
      %v2397 = vadd.f32 0.0, %v2396
      %v2398 = vpop.f32.mrb[0].mxu0
      %2399 = vmatprep.mubr.f32.mxu0 0.0
      %2400 = vmatmul.mubr.f32.gmra.mrb[0].mxu0 %v1974
      %v2401 = vpop.f32.mrb[0].mxu0
      %v2402 = vadd.f32 0.0, %v2401
      %v2403 = vpop.f32.mrb[0].mxu0
      %2404 = vmatprep.mubr.f32.mxu0 0.0
      %2405 = vmatmul.mubr.f32.gmra.mrb[0].mxu0 %v1977
      %v2406 = vpop.f32.mrb[0].mxu0
      %v2407 = vadd.f32 0.0, %v2406
      %v2408 = vpop.f32.mrb[0].mxu0
      %2409 = vmatprep.mubr.f32.mxu0 0.0
      %2410 = vmatmul.mubr.f32.gmra.mrb[0].mxu0 %v1980
      %v2411 = vpop.f32.mrb[0].mxu0
      %v2412 = vadd.f32 0.0, %v2411
      %v2413 = vpop.f32.mrb[0].mxu0
      %2414 = vmatprep.mubr.f32.mxu0 0.0
      %2415 = vmatmul.mubr.f32.gmra.mrb[0].mxu0 %v1983
      %v2416 = vpop.f32.mrb[0].mxu0
      %v2417 = vadd.f32 0.0, %v2416
      %v2418 = vpop.f32.mrb[0].mxu0
      %2419 = vmatprep.mubr.f32.mxu0 0.0
      %2420 = vmatmul.mubr.f32.gmra.mrb[0].mxu0 %v1986
      %v2421 = vpop.f32.mrb[0].mxu0
      %v2422 = vadd.f32 0.0, %v2421
      %v2423 = vpop.f32.mrb[0].mxu0
      %2424 = vmatprep.mubr.f32.mxu0 0.0
      %2425 = vmatmul.mubr.f32.gmra.mrb[0].mxu0 %v1989
      %v2426 = vpop.f32.mrb[0].mxu0
      %v2427 = vadd.f32 0.0, %v2426
      %v2428 = vpop.f32.mrb[0].mxu0
      %2429 = vmatprep.mubr.f32.mxu0 0.0
      %2430 = vmatmul.mubr.f32.gmra.mrb[0].mxu0 %v2290
      %v2431 = vpop.f32.mrb[0].mxu0
      %v2432 = vadd.f32 0.0, %v2431
      %v2433 = vpop.f32.mrb[0].mxu0
      %2434 = vmatprep.mubr.f32.mxu0 0.0
      %2435 = vmatmul.mubr.f32.gmra.mrb[0].mxu0 %v2293
      %v2436 = vpop.f32.mrb[0].mxu0
      %v2437 = vadd.f32 0.0, %v2436
      %v2438 = vpop.f32.mrb[0].mxu0
      %2439 = vdwg.mxu0
      %v2440 = vadd.f32 %v2209, %v2362
      %v2441 = vadd.f32 %v2214, %v2367
      %v2442 = vadd.f32 %v2219, %v2372
      %v2443 = vadd.f32 %v2224, %v2377
      %v2444 = vadd.f32 %v2229, %v2382
      %v2445 = vadd.f32 %v2234, %v2387
      %v2446 = vadd.f32 %v2239, %v2392
      %v2447 = vadd.f32 %v2244, %v2397
      %v2448 = vadd.f32 %v2249, %v2402
      %v2449 = vadd.f32 %v2254, %v2407
      %v2450 = vadd.f32 %v2259, %v2412
      %v2451 = vadd.f32 %v2264, %v2417
      %v2452 = vadd.f32 %v2269, %v2422
      %v2453 = vadd.f32 %v2274, %v2427
      %v2454 = vadd.f32 %v2279, %v2432
      %v2455 = vadd.f32 %v2284, %v2437
      %v2456 = vld [vmem:[%s9] sm:$0x1]
      %v2458 = vlaneseq
      %v2459 = vshrl.u32 %v2458, 7
      %v2460 = vsub.s32 0, %v2459
      %v2461 = vrot.slane %v2456, %v2460
      %v2463 = vmul.f32 %v2440, %v2461
      %v2464 = vmul.f32 %v2441, %v2461
      %v2465 = vmul.f32 %v2442, %v2461
      %v2466 = vmul.f32 %v2443, %v2461
      %v2467 = vmul.f32 %v2444, %v2461
      %v2468 = vmul.f32 %v2445, %v2461
      %v2469 = vmul.f32 %v2446, %v2461
      %v2470 = vmul.f32 %v2447, %v2461
      %v2471 = vmul.f32 %v2448, %v2461
      %v2472 = vmul.f32 %v2449, %v2461
      %v2473 = vmul.f32 %v2450, %v2461
      %v2474 = vmul.f32 %v2451, %v2461
      %v2475 = vmul.f32 %v2452, %v2461
      %v2476 = vmul.f32 %v2453, %v2461
      %v2477 = vmul.f32 %v2454, %v2461
      %v2478 = vmul.f32 %v2455, %v2461
      %v2479 = vld [vmem:[%s10] sm:$0x1]
      %v2481 = vlaneseq
      %v2482 = vshrl.u32 %v2481, 7
      %v2483 = vsub.s32 0, %v2482
      %v2484 = vrot.slane %v2479, %v2483
      %v2486 = vadd.f32 %v2463, %v2484
      %v2487 = vadd.f32 %v2464, %v2484
      %v2488 = vadd.f32 %v2465, %v2484
      %v2489 = vadd.f32 %v2466, %v2484
      %v2490 = vadd.f32 %v2467, %v2484
      %v2491 = vadd.f32 %v2468, %v2484
      %v2492 = vadd.f32 %v2469, %v2484
      %v2493 = vadd.f32 %v2470, %v2484
      %v2494 = vadd.f32 %v2471, %v2484
      %v2495 = vadd.f32 %v2472, %v2484
      %v2496 = vadd.f32 %v2473, %v2484
      %v2497 = vadd.f32 %v2474, %v2484
      %v2498 = vadd.f32 %v2475, %v2484
      %v2499 = vadd.f32 %v2476, %v2484
      %v2500 = vadd.f32 %v2477, %v2484
      %v2501 = vadd.f32 %v2478, %v2484
      %v2502 = vxor.u32 %v2486, 2147483648
      %v2503 = vxor.u32 %v2487, 2147483648
      %v2504 = vxor.u32 %v2488, 2147483648
      %v2505 = vxor.u32 %v2489, 2147483648
      %v2506 = vxor.u32 %v2490, 2147483648
      %v2507 = vxor.u32 %v2491, 2147483648
      %v2508 = vxor.u32 %v2492, 2147483648
      %v2509 = vxor.u32 %v2493, 2147483648
      %v2510 = vxor.u32 %v2494, 2147483648
      %v2511 = vxor.u32 %v2495, 2147483648
      %v2512 = vxor.u32 %v2496, 2147483648
      %v2513 = vxor.u32 %v2497, 2147483648
      %v2514 = vxor.u32 %v2498, 2147483648
      %v2515 = vxor.u32 %v2499, 2147483648
      %v2516 = vxor.u32 %v2500, 2147483648
      %v2517 = vxor.u32 %v2501, 2147483648
      %v2518 = vmul.f32 %v2502, 1.442695
      %v2519 = vpow.pop %v2518
      %v2520 = vmul.f32 %v2503, 1.442695
      %v2521 = vpow.pop %v2520
      %v2522 = vmul.f32 %v2504, 1.442695
      %v2523 = vpow.pop %v2522
      %v2524 = vmul.f32 %v2505, 1.442695
      %v2525 = vpow.pop %v2524
      %v2526 = vmul.f32 %v2506, 1.442695
      %v2527 = vpow.pop %v2526
      %v2528 = vmul.f32 %v2507, 1.442695
      %v2529 = vpow.pop %v2528
      %v2530 = vmul.f32 %v2508, 1.442695
      %v2531 = vpow.pop %v2530
      %v2532 = vmul.f32 %v2509, 1.442695
      %v2533 = vpow.pop %v2532
      %v2534 = vmul.f32 %v2510, 1.442695
      %v2535 = vpow.pop %v2534
      %v2536 = vmul.f32 %v2511, 1.442695
      %v2537 = vpow.pop %v2536
      %v2538 = vmul.f32 %v2512, 1.442695
      %v2539 = vpow.pop %v2538
      %v2540 = vmul.f32 %v2513, 1.442695
      %v2541 = vpow.pop %v2540
      %v2542 = vmul.f32 %v2514, 1.442695
      %v2543 = vpow.pop %v2542
      %v2544 = vmul.f32 %v2515, 1.442695
      %v2545 = vpow.pop %v2544
      %v2546 = vmul.f32 %v2516, 1.442695
      %v2547 = vpow.pop %v2546
      %v2548 = vmul.f32 %v2517, 1.442695
      %v2549 = vpow.pop %v2548
      %v2550 = vadd.f32 %v2519, 1.0
      %v2551 = vadd.f32 %v2521, 1.0
      %v2552 = vadd.f32 %v2523, 1.0
      %v2553 = vadd.f32 %v2525, 1.0
      %v2554 = vadd.f32 %v2527, 1.0
      %v2555 = vadd.f32 %v2529, 1.0
      %v2556 = vadd.f32 %v2531, 1.0
      %v2557 = vadd.f32 %v2533, 1.0
      %v2558 = vadd.f32 %v2535, 1.0
      %v2559 = vadd.f32 %v2537, 1.0
      %v2560 = vadd.f32 %v2539, 1.0
      %v2561 = vadd.f32 %v2541, 1.0
      %v2562 = vadd.f32 %v2543, 1.0
      %v2563 = vadd.f32 %v2545, 1.0
      %v2564 = vadd.f32 %v2547, 1.0
      %v2565 = vadd.f32 %v2549, 1.0
      %v2566 = vrcp.pop %v2550
      %v2567 = vmul.f32 1.0, %v2566
      %v2568 = vrcp.pop %v2551
      %v2569 = vmul.f32 1.0, %v2568
      %v2570 = vrcp.pop %v2552
      %v2571 = vmul.f32 1.0, %v2570
      %v2572 = vrcp.pop %v2553
      %v2573 = vmul.f32 1.0, %v2572
      %v2574 = vrcp.pop %v2554
      %v2575 = vmul.f32 1.0, %v2574
      %v2576 = vrcp.pop %v2555
      %v2577 = vmul.f32 1.0, %v2576
      %v2578 = vrcp.pop %v2556
      %v2579 = vmul.f32 1.0, %v2578
      %v2580 = vrcp.pop %v2557
      %v2581 = vmul.f32 1.0, %v2580
      %v2582 = vrcp.pop %v2558
      %v2583 = vmul.f32 1.0, %v2582
      %v2584 = vrcp.pop %v2559
      %v2585 = vmul.f32 1.0, %v2584
      %v2586 = vrcp.pop %v2560
      %v2587 = vmul.f32 1.0, %v2586
      %v2588 = vrcp.pop %v2561
      %v2589 = vmul.f32 1.0, %v2588
      %v2590 = vrcp.pop %v2562
      %v2591 = vmul.f32 1.0, %v2590
      %v2592 = vrcp.pop %v2563
      %v2593 = vmul.f32 1.0, %v2592
      %v2594 = vrcp.pop %v2564
      %v2595 = vmul.f32 1.0, %v2594
      %v2596 = vrcp.pop %v2565
      %v2597 = vmul.f32 1.0, %v2596
      %v2598 = vmul.f32 %v2486, %v2567
      %v2599 = vmul.f32 %v2487, %v2569
      %v2600 = vmul.f32 %v2488, %v2571
      %v2601 = vmul.f32 %v2489, %v2573
      %v2602 = vmul.f32 %v2490, %v2575
      %v2603 = vmul.f32 %v2491, %v2577
      %v2604 = vmul.f32 %v2492, %v2579
      %v2605 = vmul.f32 %v2493, %v2581
      %v2606 = vmul.f32 %v2494, %v2583
      %v2607 = vmul.f32 %v2495, %v2585
      %v2608 = vmul.f32 %v2496, %v2587
      %v2609 = vmul.f32 %v2497, %v2589
      %v2610 = vmul.f32 %v2498, %v2591
      %v2611 = vmul.f32 %v2499, %v2593
      %v2612 = vmul.f32 %v2500, %v2595
      %v2613 = vmul.f32 %v2501, %v2597
      %2614 = vst.msk [vmem:[%s552] sm:$0xff] %vm1942, %v2598
      %2615 = vst.msk [vmem:[%s552 + $0x8] sm:$0xff] %vm1942, %v2599
      %2616 = vst.msk [vmem:[%s552 + $0x10] sm:$0xff] %vm1942, %v2600
      %2617 = vst.msk [vmem:[%s552 + $0x18] sm:$0xff] %vm1942, %v2601
      %2618 = vst.msk [vmem:[%s552 + $0x20] sm:$0xff] %vm1942, %v2602
      %2619 = vst.msk [vmem:[%s552 + $0x28] sm:$0xff] %vm1942, %v2603
      %2620 = vst.msk [vmem:[%s552 + $0x30] sm:$0xff] %vm1942, %v2604
      %2621 = vst.msk [vmem:[%s552 + $0x38] sm:$0xff] %vm1942, %v2605
      %2622 = vst.msk [vmem:[%s552 + $0x40] sm:$0xff] %vm1942, %v2606
      %2623 = vst.msk [vmem:[%s552 + $0x48] sm:$0xff] %vm1942, %v2607
      %2624 = vst.msk [vmem:[%s552 + $0x50] sm:$0xff] %vm1942, %v2608
      %2625 = vst.msk [vmem:[%s552 + $0x58] sm:$0xff] %vm1942, %v2609
      %2626 = vst.msk [vmem:[%s552 + $0x60] sm:$0xff] %vm1942, %v2610
      %2627 = vst.msk [vmem:[%s552 + $0x68] sm:$0xff] %vm1942, %v2611
      %2628 = vst.msk [vmem:[%s552 + $0x70] sm:$0xff] %vm1942, %v2612
      %2629 = vst.msk [vmem:[%s552 + $0x78] sm:$0xff] %vm1942, %v2613
      %s2630 = smul.u32 16, %s27
      %p2631 = scmp.lt.s32.totalorder %s26, 1
      %s2632 = scalar_select %p2631, %s26, 1
      %p2633 = scmp.lt.s32.totalorder %s2630, 31
      %s2634 = scalar_select %p2633, %s2630, 31
      %s2635 = smul.addr %s2632, 32
      %s2636 = sadd.s32 %s2634, %s2635
      %s2637 = smul.addr %s2636, 8
      %s2638 = scalar_lea.vmem %s11, %s2637
      // Predicated region
      $region65: #{tpu_custom_call.1} parent=63 // pred_check
        %p2639 = pneg %p322
      $region66: #{tpu_custom_call.1} parent=63 // pred_check_branch
        %2641 = sbr.rel (%p2639) target = $region68
      $region67: #{tpu_custom_call.1} parent=63 // pred_region
        %s2642 = smul.u32 16, %s27
      $region68: #{tpu_custom_call.1} parent=63 // pred_fallthru
        _
    $region64: #{tpu_custom_call.1} parent=5 // pred_fallthru
      _
    %p2643 = scmp.le.s32.totalorder 2, %s17
    // Predicated region
    $region69: #{tpu_custom_call.1} parent=5 // pred_check
      %p2644 = pneg %p2643
    $region70: #{tpu_custom_call.1} parent=5 // pred_check_branch
      %2646 = sbr.rel (%p2644) target = $region72
    $region71: #{tpu_custom_call.1} parent=5 // pred_region
      %s2647 = ssub.s32 %s17, 2
      // Predicated region
      $region73: #{tpu_custom_call.1} parent=71 // pred_check
        %p2648 = pneg %p328
      $region74: #{tpu_custom_call.1} parent=71 // pred_check_branch
        %2650 = sbr.rel (%p2648) target = $region76
      $region75: #{tpu_custom_call.1} parent=71 // pred_region
        %s2651 = smul.u32 16, %s29
        %p2652 = scmp.lt.s32.totalorder %s28, 1
        %s2653 = scalar_select %p2652, %s28, 1
        %p2654 = scmp.lt.s32.totalorder %s2651, 31
        %s2655 = scalar_select %p2654, %s2651, 31
        %s2656 = smul.addr %s2653, 32
        %s2657 = sadd.s32 %s2655, %s2656
        %s2658 = smul.addr %s2657, 8
        %s2659 = scalar_lea.vmem %s11, %s2658
      $region76: #{tpu_custom_call.1} parent=71 // pred_fallthru
        _
    $region72: #{tpu_custom_call.1} parent=5 // pred_fallthru
      _
  $region6: #{tpu_custom_call.1} parent=0 // loop_footer
    %s21 = sadd.s32 1, %s17
  $region7: #{tpu_custom_call.1} parent=0 // loop_footer_branch
    %16 = sbr.rel target = $region3
  $region8: #{tpu_custom_call.1} parent=0 // loop_exit
    _

</llo_original>
